<compile_context>
chip_gen: v6e
topology: v6e:2x2x1
jax: 0.10.0
libtpu: 0.0.40
codegen_flags: <defaults>
</compile_context>

<pallas_src>
import numpy as np

import jax
import jax.numpy as jnp
from jax.experimental import pallas as pl
from jax.experimental.pallas import tpu as pltpu


_BN_EPS = 1e-3
_COMPUTE_DTYPE = jnp.bfloat16     # MXU-native matmul dtype; accumulation stays f32

# Conv order inside the fused kernel: (name, tap_axis, dilation_key, bn folded into it)
# dilation_key "d" means the module's `dilated` value.
_CONV_DEFS = (
    ("3x1_1_l", "H", 1, None),
    ("1x3_1_l", "W", 1, "bn1_l"),
    ("3x1_2_l", "H", "d", None),
    ("1x3_2_l", "W", "d", "bn2_l"),
    ("1x3_1_r", "W", 1, None),
    ("3x1_1_r", "H", 1, "bn1_r"),
    ("1x3_2_r", "W", "d", None),
    ("3x1_2_r", "H", "d", "bn2_r"),
)


def _conv_axes(dilated):
    return tuple((axis, dilated if dkey == "d" else 1)
                 for _, axis, dkey, _ in _CONV_DEFS)


def _make_kernel(C, C2, H, W, dilated, mask_index):
    HW = H * W
    axes = _conv_axes(dilated)

    def kernel(x_ref, w_ref, b_ref, m_ref, p_ref, o_ref):
        x = x_ref[0].astype(jnp.float32)                    # (C, HW)
        x1 = x[:C2]
        x2 = x[C2:]

        def conv(act, idx):
            # One MXU matmul with K = 3*C2: the three taps are stacked along the
            # contraction axis.  Shifted copies come from pltpu.roll (circular)
            # + precomputed boundary masks, reproducing exact zero padding.
            axis, d = axes[idx]
            flat = d * W if axis == "H" else d              # flattened tap stride
            lo = pltpu.roll(act, shift=flat % HW, axis=1)   # tap offset -d
            lo = lo * m_ref[mask_index[(axis, -d)]]
            hi = pltpu.roll(act, shift=(-flat) % HW, axis=1)  # tap offset +d
            hi = hi * m_ref[mask_index[(axis, d)]]
            stacked = jnp.concatenate([lo, act, hi], axis=0)  # (3*C2, HW) f32
            return (jnp.dot(w_ref[idx], stacked.astype(_COMPUTE_DTYPE),
                            preferred_element_type=jnp.float32)
                    + b_ref[idx])

        def relu(v):
            return jnp.maximum(v, 0.0)

        # left branch: 3x1 -> relu -> 1x3(+bn1_l) -> relu -> 3x1(dil) -> relu -> 1x3(dil)(+bn2_l)
        o1 = relu(conv(x1, 0))
        o1 = relu(conv(o1, 1))
        o1 = relu(conv(o1, 2))
        o1 = conv(o1, 3)

        # right branch: 1x3 -> relu -> 3x1(+bn1_r) -> relu -> 1x3(dil) -> relu -> 3x1(dil)(+bn2_r)
        o2 = relu(conv(x2, 4))
        o2 = relu(conv(o2, 5))
        o2 = relu(conv(o2, 6))
        o2 = conv(o2, 7)

        # residual add + relu, then channel_shuffle(groups=2) as a SINGLE
        # constant f32 permutation matmul (exact; output store stays one
        # contiguous lane-dense slab).
        pre = jnp.concatenate([relu(x1 + o1), relu(x2 + o2)], axis=0)   # (C, HW)
        y = jnp.dot(p_ref[...], pre, preferred_element_type=jnp.float32)
        o_ref[0] = y.astype(o_ref.dtype)

    return kernel


def ss_nbt_forward(x, params, dilated, dropprob=0.0):
    """Fused Pallas forward of SS_nbt_module (inference semantics)."""
    # TODO(synk): training-mode Dropout2d and batch-statistics BatchNorm are not
    # implemented; BN uses running-stats (eval) semantics folded into the convs,
    # and dropout is identity (exact for dropprob == 0 / eval mode).
    N, C, H, W = x.shape
    C2 = C // 2
    HW = H * W

    # --- fold BN into preceding conv, stack the 3 taps along K, cast to bf16 ---
    w_list, b_list = [], []
    for name, axis, dkey, bn in _CONV_DEFS:
        w = params["w" + name].astype(jnp.float32)                # (C2, C2, kh, kw)
        b = params["b" + name].astype(jnp.float32)                # (C2,)
        w_taps = w[:, :, :, 0] if axis == "H" else w[:, :, 0, :]  # (Cout, Cin, 3)
        w_taps = jnp.transpose(w_taps, (2, 0, 1))                 # (3, Cout, Cin)
        if bn is not None:
            gamma, beta, mean, var = (p.astype(jnp.float32) for p in params[bn])
            s = gamma / jnp.sqrt(var + _BN_EPS)
            t = beta - mean * s
            w_taps = w_taps * s[None, :, None]
            b = b * s + t
        # (Cout, 3*Cin) with tap-major K (matches concat([lo, center, hi], axis=0))
        w_list.append(jnp.transpose(w_taps, (1, 0, 2)).reshape(C2, 3 * C2))
        b_list.append(b)
    w_all = jnp.stack(w_list).astype(_COMPUTE_DTYPE)              # (8, C2, 3*C2)
    b_all = jnp.stack(b_list)[:, :, None]                         # (8, C2, 1) f32

    # --- boundary masks: zero lanes that wrap a row (1x3 taps) or the image
    #     top/bottom (3x1 taps) after the circular roll ---
    wpos = np.arange(HW) % W
    hpos = np.arange(HW) // W
    axes = _conv_axes(dilated)
    mask_keys = []
    for axis, d in axes:
        for off in (-d, d):
            if (axis, off) not in mask_keys:
                mask_keys.append((axis, off))
    mask_index = {k: i for i, k in enumerate(mask_keys)}
    rows = []
    for axis, off in mask_keys:
        pos, lim = (hpos, H) if axis == "H" else (wpos, W)
        rows.append(((pos + off >= 0) & (pos + off < lim)).astype(np.float32))
    masks = jnp.asarray(np.stack(rows))[:, None, :]               # (n_masks, 1, HW)
    n_masks = masks.shape[0]

    # --- channel_shuffle(groups=2) as one constant permutation matrix (f32) ---
    P = np.zeros((C, C), np.float32)
    for k in range(C):
        P[k, (k % 2) * C2 + k // 2] = 1.0
    perm = jnp.asarray(P)                                         # (C, C)

    x_flat = x.reshape(N, C, HW)
    kernel = _make_kernel(C, C2, H, W, dilated, mask_index)

    # --- generation-aware VMEM limit (v7x: 64 MiB physical; v5e/v6e: 128 MiB) ---
    try:
        vmem_cap = int(getattr(pltpu.get_tpu_info(), "vmem_capacity_bytes", 0)) or (64 << 20)
    except Exception:
        vmem_cap = 64 << 20
    vmem_limit = max(32 << 20, min(int(0.75 * vmem_cap), 100 << 20))

    flops = int(N * HW * (8 * 2 * C2 * 3 * C2 + 2 * C * C))
    const_bytes = int(w_all.size * 2 + (b_all.size + masks.size + perm.size) * 4)
    bytes_accessed = int(2 * N * C * HW * x.dtype.itemsize + const_bytes)

    out_flat = pl.pallas_call(
        kernel,
        out_shape=jax.ShapeDtypeStruct((N, C, HW), x.dtype),
        grid_spec=pltpu.PrefetchScalarGridSpec(
            num_scalar_prefetch=0,
            grid=(N,),          # one image per step; grid >= 2 feeds both v7x cores
            in_specs=[
                pl.BlockSpec((1, C, HW), lambda i: (i, 0, 0)),
                pl.BlockSpec((8, C2, 3 * C2), lambda i: (0, 0, 0)),
                pl.BlockSpec((8, C2, 1), lambda i: (0, 0, 0)),
                pl.BlockSpec((n_masks, 1, HW), lambda i: (0, 0, 0)),
                pl.BlockSpec((C, C), lambda i: (0, 0)),
            ],
            out_specs=pl.BlockSpec((1, C, HW), lambda i: (i, 0, 0)),
        ),
        compiler_params=pltpu.CompilerParams(
            dimension_semantics=("parallel",),
            vmem_limit_bytes=vmem_limit,
        ),
        cost_estimate=pl.CostEstimate(
            flops=flops, transcendentals=0, bytes_accessed=bytes_accessed),
    )(x_flat, w_all, b_all, masks, perm)

    return out_flat.reshape(N, C, H, W)


# ----------------------- parameter init & pure-JAX reference -----------------------

def _init_params(key, chann):
    C2 = chann // 2
    conv_shapes = {
        "3x1_1_l": (3, 1), "1x3_1_l": (1, 3), "3x1_2_l": (3, 1), "1x3_2_l": (1, 3),
        "1x3_1_r": (1, 3), "3x1_1_r": (3, 1), "1x3_2_r": (1, 3), "3x1_2_r": (3, 1),
    }
    keys = jax.random.split(key, 2 * len(conv_shapes) + 4 * 4)
    params = {}
    i = 0
    for name, (kh, kw) in conv_shapes.items():
        fan_in = C2 * kh * kw
        params["w" + name] = (jax.random.normal(keys[i], (C2, C2, kh, kw), jnp.float32)
                              / np.sqrt(fan_in))
        i += 1
        params["b" + name] = 0.1 * jax.random.normal(keys[i], (C2,), jnp.float32)
        i += 1
    for bn in ("bn1_l", "bn2_l", "bn1_r", "bn2_r"):
        gamma = 1.0 + 0.1 * jax.random.normal(keys[i], (C2,), jnp.float32); i += 1
        beta = 0.1 * jax.random.normal(keys[i], (C2,), jnp.float32); i += 1
        mean = 0.1 * jax.random.normal(keys[i], (C2,), jnp.float32); i += 1
        var = 0.9 + 0.2 * jax.nn.sigmoid(jax.random.normal(keys[i], (C2,), jnp.float32)); i += 1
        params[bn] = (gamma, beta, mean, var)
    return params


def _conv2d_ref(x, w, b, dilation):
    kh, kw = w.shape[2], w.shape[3]
    dh, dw = dilation
    pad_h = (kh - 1) // 2 * dh
    pad_w = (kw - 1) // 2 * dw
    y = jax.lax.conv_general_dilated(
        x, w, window_strides=(1, 1),
        padding=((pad_h, pad_h), (pad_w, pad_w)),
        rhs_dilation=(dh, dw),
        dimension_numbers=("NCHW", "OIHW", "NCHW"),
        precision=jax.lax.Precision.HIGHEST)
    return y + b[None, :, None, None]


def _bn_ref(x, bn_params):
    gamma, beta, mean, var = bn_params
    s = gamma / jnp.sqrt(var + _BN_EPS)
    t = beta - mean * s
    return x * s[None, :, None, None] + t[None, :, None, None]


def ss_nbt_reference(x, params, dilated):
    relu = jax.nn.relu
    N, C, H, W = x.shape
    C2 = C // 2
    x1, x2 = x[:, :C2], x[:, C2:]

    o1 = relu(_conv2d_ref(x1, params["w3x1_1_l"], params["b3x1_1_l"], (1, 1)))
    o1 = _conv2d_ref(o1, params["w1x3_1_l"], params["b1x3_1_l"], (1, 1))
    o1 = relu(_bn_ref(o1, params["bn1_l"]))
    o1 = relu(_conv2d_ref(o1, params["w3x1_2_l"], params["b3x1_2_l"], (dilated, 1)))
    o1 = _conv2d_ref(o1, params["w1x3_2_l"], params["b1x3_2_l"], (1, dilated))
    o1 = _bn_ref(o1, params["bn2_l"])

    o2 = relu(_conv2d_ref(x2, params["w1x3_1_r"], params["b1x3_1_r"], (1, 1)))
    o2 = _conv2d_ref(o2, params["w3x1_1_r"], params["b3x1_1_r"], (1, 1))
    o2 = relu(_bn_ref(o2, params["bn1_r"]))
    o2 = relu(_conv2d_ref(o2, params["w1x3_2_r"], params["b1x3_2_r"], (1, dilated)))
    o2 = _conv2d_ref(o2, params["w3x1_2_r"], params["b3x1_2_r"], (dilated, 1))
    o2 = _bn_ref(o2, params["bn2_r"])

    out = jnp.concatenate([o1, o2], axis=1)
    out = relu(x + out)
    out = out.reshape(N, 2, C2, H, W).transpose(0, 2, 1, 3, 4).reshape(N, C, H, W)
    return out


class SSnbtModule:
    """JAX/Pallas port of LEDNet SS_nbt_module (forward, inference semantics)."""

    def __init__(self, chann, dropprob, dilated, key):
        assert chann % 2 == 0
        self.chann = chann
        self.dropprob = dropprob
        self.dilated = dilated
        self.params = _init_params(key, chann)

    def __call__(self, x):
        return ss_nbt_forward(x, self.params, self.dilated, self.dropprob)


if __name__ == "__main__":
    key = jax.random.PRNGKey(0)
    k_param, k_x = jax.random.split(key)

    N, chann, H, W = 2, 16, 16, 16
    dilated = 2

    module = SSnbtModule(chann=chann, dropprob=0.0, dilated=dilated, key=k_param)
    x = jax.random.normal(k_x, (N, chann, H, W), dtype=jnp.float32)

    y = module(x)
    y = jax.block_until_ready(y)

    y_ref = ss_nbt_reference(x, module.params, dilated)
    assert y.shape == (N, chann, H, W)
    err = float(jnp.max(jnp.abs(y - y_ref)))
    # bf16-MXU tolerance: activations/weights are bf16-rounded across the four
    # chained convs per branch (reference is pure f32).
    assert err < 6e-2, f"max abs error too large: {err}"

    print("KERNEL_OK")
</pallas_src>

<mosaic_0001>
module attributes {stable_mosaic.version = 11 : i64} {
  func.func @kernel(%arg0: i32, %arg1: memref<1x16x256xf32, #tpu.memory_space<vmem>>, %arg2: memref<8x8x24xbf16, #tpu.memory_space<vmem>>, %arg3: memref<8x8x1xf32, #tpu.memory_space<vmem>>, %arg4: memref<8x1x256xf32, #tpu.memory_space<vmem>>, %arg5: memref<16x16xf32, #tpu.memory_space<vmem>>, %arg6: memref<1x16x256xf32, #tpu.memory_space<vmem>>) attributes {dimension_semantics = [#tpu.dimension_semantics<parallel>], iteration_bounds = array<i64: 2>, scalar_prefetch = 0 : i64, scratch_operands = 0 : i64, tpu.core_type = #tpu.core_type<tc>, window_params = [{transform_indices = @transform_0, window_bounds = array<i64: 1, 16, 256>}, {pipeline_mode = #tpu.pipeline_mode<synchronous>, transform_indices = @transform_1, window_bounds = array<i64: 8, 8, 24>}, {pipeline_mode = #tpu.pipeline_mode<synchronous>, transform_indices = @transform_2, window_bounds = array<i64: 8, 8, 1>}, {pipeline_mode = #tpu.pipeline_mode<synchronous>, transform_indices = @transform_3, window_bounds = array<i64: 8, 1, 256>}, {pipeline_mode = #tpu.pipeline_mode<synchronous>, transform_indices = @transform_4, window_bounds = array<i64: 16, 16>}, {transform_indices = @transform_5, window_bounds = array<i64: 1, 16, 256>}]} {
    %c0 = arith.constant 0 : index
    %c0_0 = arith.constant 0 : index
    %c0_1 = arith.constant 0 : index
    %0 = vector.load %arg1[%c0, %c0_0, %c0_1] : memref<1x16x256xf32, #tpu.memory_space<vmem>>, vector<1x16x256xf32>
    %1 = vector.shape_cast %0 : vector<1x16x256xf32> to vector<16x256xf32>
    %2 = vector.extract_strided_slice %1 {offsets = [0, 0], sizes = [8, 256], strides = [1, 1]} : vector<16x256xf32> to vector<8x256xf32>
    %3 = vector.extract_strided_slice %1 {offsets = [8, 0], sizes = [8, 256], strides = [1, 1]} : vector<16x256xf32> to vector<8x256xf32>
    %c16_i32 = arith.constant 16 : i32
    %4 = tpu.dynamic_rotate %2 by %c16_i32 dim 1 : vector<8x256xf32>, i32 -> vector<8x256xf32>
    %c0_2 = arith.constant 0 : index
    %c0_3 = arith.constant 0 : index
    %c0_4 = arith.constant 0 : index
    %5 = vector.load %arg4[%c0_2, %c0_3, %c0_4] : memref<8x1x256xf32, #tpu.memory_space<vmem>>, vector<1x1x256xf32>
    %6 = vector.shape_cast %5 : vector<1x1x256xf32> to vector<1x256xf32>
    %7 = vector.broadcast %6 : vector<1x256xf32> to vector<8x256xf32>
    %8 = arith.mulf %4, %7 : vector<8x256xf32>
    %c240_i32 = arith.constant 240 : i32
    %9 = tpu.dynamic_rotate %2 by %c240_i32 dim 1 : vector<8x256xf32>, i32 -> vector<8x256xf32>
    %c1 = arith.constant 1 : index
    %c0_5 = arith.constant 0 : index
    %c0_6 = arith.constant 0 : index
    %10 = vector.load %arg4[%c1, %c0_5, %c0_6] : memref<8x1x256xf32, #tpu.memory_space<vmem>>, vector<1x1x256xf32>
    %11 = vector.shape_cast %10 : vector<1x1x256xf32> to vector<1x256xf32>
    %12 = vector.broadcast %11 : vector<1x256xf32> to vector<8x256xf32>
    %13 = arith.mulf %9, %12 : vector<8x256xf32>
    %14 = tpu.concatenate %8, %2, %13 in 0 : vector<8x256xf32>, vector<8x256xf32>, vector<8x256xf32> -> vector<24x256xf32>
    %c0_7 = arith.constant 0 : index
    %c0_8 = arith.constant 0 : index
    %c0_9 = arith.constant 0 : index
    %15 = vector.load %arg2[%c0_7, %c0_8, %c0_9] : memref<8x8x24xbf16, #tpu.memory_space<vmem>>, vector<1x8x24xbf16>
    %16 = vector.shape_cast %15 : vector<1x8x24xbf16> to vector<8x24xbf16>
    %17 = arith.truncf %14 : vector<24x256xf32> to vector<24x256xbf16>
    %cst = arith.constant dense<0.000000e+00> : vector<8x256xf32>
    %18 = tpu.matmul %16, %17, %cst {dimension_numbers = #tpu.dot_dimension_numbers<[1], [0], [0], [1], [0, 0, 1, 1], [], []>} : vector<8x24xbf16>, vector<24x256xbf16>, vector<8x256xf32> -> vector<8x256xf32>
    %c0_10 = arith.constant 0 : index
    %c0_11 = arith.constant 0 : index
    %c0_12 = arith.constant 0 : index
    %19 = vector.load %arg3[%c0_10, %c0_11, %c0_12] : memref<8x8x1xf32, #tpu.memory_space<vmem>>, vector<1x8x1xf32>
    %20 = vector.shape_cast %19 : vector<1x8x1xf32> to vector<8x1xf32>
    %21 = vector.broadcast %20 : vector<8x1xf32> to vector<8x256xf32>
    %22 = arith.addf %18, %21 : vector<8x256xf32>
    %cst_13 = arith.constant 0.000000e+00 : f32
    %23 = vector.broadcast %cst_13 : f32 to vector<8x256xf32>
    %24 = arith.maximumf %22, %23 : vector<8x256xf32>
    %c1_i32 = arith.constant 1 : i32
    %25 = tpu.dynamic_rotate %24 by %c1_i32 dim 1 : vector<8x256xf32>, i32 -> vector<8x256xf32>
    %c2 = arith.constant 2 : index
    %c0_14 = arith.constant 0 : index
    %c0_15 = arith.constant 0 : index
    %26 = vector.load %arg4[%c2, %c0_14, %c0_15] : memref<8x1x256xf32, #tpu.memory_space<vmem>>, vector<1x1x256xf32>
    %27 = vector.shape_cast %26 : vector<1x1x256xf32> to vector<1x256xf32>
    %28 = vector.broadcast %27 : vector<1x256xf32> to vector<8x256xf32>
    %29 = arith.mulf %25, %28 : vector<8x256xf32>
    %c255_i32 = arith.constant 255 : i32
    %30 = tpu.dynamic_rotate %24 by %c255_i32 dim 1 : vector<8x256xf32>, i32 -> vector<8x256xf32>
    %c3 = arith.constant 3 : index
    %c0_16 = arith.constant 0 : index
    %c0_17 = arith.constant 0 : index
    %31 = vector.load %arg4[%c3, %c0_16, %c0_17] : memref<8x1x256xf32, #tpu.memory_space<vmem>>, vector<1x1x256xf32>
    %32 = vector.shape_cast %31 : vector<1x1x256xf32> to vector<1x256xf32>
    %33 = vector.broadcast %32 : vector<1x256xf32> to vector<8x256xf32>
    %34 = arith.mulf %30, %33 : vector<8x256xf32>
    %35 = tpu.concatenate %29, %24, %34 in 0 : vector<8x256xf32>, vector<8x256xf32>, vector<8x256xf32> -> vector<24x256xf32>
    %c1_18 = arith.constant 1 : index
    %c0_19 = arith.constant 0 : index
    %c0_20 = arith.constant 0 : index
    %36 = vector.load %arg2[%c1_18, %c0_19, %c0_20] : memref<8x8x24xbf16, #tpu.memory_space<vmem>>, vector<1x8x24xbf16>
    %37 = vector.shape_cast %36 : vector<1x8x24xbf16> to vector<8x24xbf16>
    %38 = arith.truncf %35 : vector<24x256xf32> to vector<24x256xbf16>
    %cst_21 = arith.constant dense<0.000000e+00> : vector<8x256xf32>
    %39 = tpu.matmul %37, %38, %cst_21 {dimension_numbers = #tpu.dot_dimension_numbers<[1], [0], [0], [1], [0, 0, 1, 1], [], []>} : vector<8x24xbf16>, vector<24x256xbf16>, vector<8x256xf32> -> vector<8x256xf32>
    %c1_22 = arith.constant 1 : index
    %c0_23 = arith.constant 0 : index
    %c0_24 = arith.constant 0 : index
    %40 = vector.load %arg3[%c1_22, %c0_23, %c0_24] : memref<8x8x1xf32, #tpu.memory_space<vmem>>, vector<1x8x1xf32>
    %41 = vector.shape_cast %40 : vector<1x8x1xf32> to vector<8x1xf32>
    %42 = vector.broadcast %41 : vector<8x1xf32> to vector<8x256xf32>
    %43 = arith.addf %39, %42 : vector<8x256xf32>
    %cst_25 = arith.constant 0.000000e+00 : f32
    %44 = vector.broadcast %cst_25 : f32 to vector<8x256xf32>
    %45 = arith.maximumf %43, %44 : vector<8x256xf32>
    %c32_i32 = arith.constant 32 : i32
    %46 = tpu.dynamic_rotate %45 by %c32_i32 dim 1 : vector<8x256xf32>, i32 -> vector<8x256xf32>
    %c4 = arith.constant 4 : index
    %c0_26 = arith.constant 0 : index
    %c0_27 = arith.constant 0 : index
    %47 = vector.load %arg4[%c4, %c0_26, %c0_27] : memref<8x1x256xf32, #tpu.memory_space<vmem>>, vector<1x1x256xf32>
    %48 = vector.shape_cast %47 : vector<1x1x256xf32> to vector<1x256xf32>
    %49 = vector.broadcast %48 : vector<1x256xf32> to vector<8x256xf32>
    %50 = arith.mulf %46, %49 : vector<8x256xf32>
    %c224_i32 = arith.constant 224 : i32
    %51 = tpu.dynamic_rotate %45 by %c224_i32 dim 1 : vector<8x256xf32>, i32 -> vector<8x256xf32>
    %c5 = arith.constant 5 : index
    %c0_28 = arith.constant 0 : index
    %c0_29 = arith.constant 0 : index
    %52 = vector.load %arg4[%c5, %c0_28, %c0_29] : memref<8x1x256xf32, #tpu.memory_space<vmem>>, vector<1x1x256xf32>
    %53 = vector.shape_cast %52 : vector<1x1x256xf32> to vector<1x256xf32>
    %54 = vector.broadcast %53 : vector<1x256xf32> to vector<8x256xf32>
    %55 = arith.mulf %51, %54 : vector<8x256xf32>
    %56 = tpu.concatenate %50, %45, %55 in 0 : vector<8x256xf32>, vector<8x256xf32>, vector<8x256xf32> -> vector<24x256xf32>
    %c2_30 = arith.constant 2 : index
    %c0_31 = arith.constant 0 : index
    %c0_32 = arith.constant 0 : index
    %57 = vector.load %arg2[%c2_30, %c0_31, %c0_32] : memref<8x8x24xbf16, #tpu.memory_space<vmem>>, vector<1x8x24xbf16>
    %58 = vector.shape_cast %57 : vector<1x8x24xbf16> to vector<8x24xbf16>
    %59 = arith.truncf %56 : vector<24x256xf32> to vector<24x256xbf16>
    %cst_33 = arith.constant dense<0.000000e+00> : vector<8x256xf32>
    %60 = tpu.matmul %58, %59, %cst_33 {dimension_numbers = #tpu.dot_dimension_numbers<[1], [0], [0], [1], [0, 0, 1, 1], [], []>} : vector<8x24xbf16>, vector<24x256xbf16>, vector<8x256xf32> -> vector<8x256xf32>
    %c2_34 = arith.constant 2 : index
    %c0_35 = arith.constant 0 : index
    %c0_36 = arith.constant 0 : index
    %61 = vector.load %arg3[%c2_34, %c0_35, %c0_36] : memref<8x8x1xf32, #tpu.memory_space<vmem>>, vector<1x8x1xf32>
    %62 = vector.shape_cast %61 : vector<1x8x1xf32> to vector<8x1xf32>
    %63 = vector.broadcast %62 : vector<8x1xf32> to vector<8x256xf32>
    %64 = arith.addf %60, %63 : vector<8x256xf32>
    %cst_37 = arith.constant 0.000000e+00 : f32
    %65 = vector.broadcast %cst_37 : f32 to vector<8x256xf32>
    %66 = arith.maximumf %64, %65 : vector<8x256xf32>
    %c2_i32 = arith.constant 2 : i32
    %67 = tpu.dynamic_rotate %66 by %c2_i32 dim 1 : vector<8x256xf32>, i32 -> vector<8x256xf32>
    %c6 = arith.constant 6 : index
    %c0_38 = arith.constant 0 : index
    %c0_39 = arith.constant 0 : index
    %68 = vector.load %arg4[%c6, %c0_38, %c0_39] : memref<8x1x256xf32, #tpu.memory_space<vmem>>, vector<1x1x256xf32>
    %69 = vector.shape_cast %68 : vector<1x1x256xf32> to vector<1x256xf32>
    %70 = vector.broadcast %69 : vector<1x256xf32> to vector<8x256xf32>
    %71 = arith.mulf %67, %70 : vector<8x256xf32>
    %c254_i32 = arith.constant 254 : i32
    %72 = tpu.dynamic_rotate %66 by %c254_i32 dim 1 : vector<8x256xf32>, i32 -> vector<8x256xf32>
    %c7 = arith.constant 7 : index
    %c0_40 = arith.constant 0 : index
    %c0_41 = arith.constant 0 : index
    %73 = vector.load %arg4[%c7, %c0_40, %c0_41] : memref<8x1x256xf32, #tpu.memory_space<vmem>>, vector<1x1x256xf32>
    %74 = vector.shape_cast %73 : vector<1x1x256xf32> to vector<1x256xf32>
    %75 = vector.broadcast %74 : vector<1x256xf32> to vector<8x256xf32>
    %76 = arith.mulf %72, %75 : vector<8x256xf32>
    %77 = tpu.concatenate %71, %66, %76 in 0 : vector<8x256xf32>, vector<8x256xf32>, vector<8x256xf32> -> vector<24x256xf32>
    %c3_42 = arith.constant 3 : index
    %c0_43 = arith.constant 0 : index
    %c0_44 = arith.constant 0 : index
    %78 = vector.load %arg2[%c3_42, %c0_43, %c0_44] : memref<8x8x24xbf16, #tpu.memory_space<vmem>>, vector<1x8x24xbf16>
    %79 = vector.shape_cast %78 : vector<1x8x24xbf16> to vector<8x24xbf16>
    %80 = arith.truncf %77 : vector<24x256xf32> to vector<24x256xbf16>
    %cst_45 = arith.constant dense<0.000000e+00> : vector<8x256xf32>
    %81 = tpu.matmul %79, %80, %cst_45 {dimension_numbers = #tpu.dot_dimension_numbers<[1], [0], [0], [1], [0, 0, 1, 1], [], []>} : vector<8x24xbf16>, vector<24x256xbf16>, vector<8x256xf32> -> vector<8x256xf32>
    %c3_46 = arith.constant 3 : index
    %c0_47 = arith.constant 0 : index
    %c0_48 = arith.constant 0 : index
    %82 = vector.load %arg3[%c3_46, %c0_47, %c0_48] : memref<8x8x1xf32, #tpu.memory_space<vmem>>, vector<1x8x1xf32>
    %83 = vector.shape_cast %82 : vector<1x8x1xf32> to vector<8x1xf32>
    %84 = vector.broadcast %83 : vector<8x1xf32> to vector<8x256xf32>
    %85 = arith.addf %81, %84 : vector<8x256xf32>
    %c1_i32_49 = arith.constant 1 : i32
    %86 = tpu.dynamic_rotate %3 by %c1_i32_49 dim 1 : vector<8x256xf32>, i32 -> vector<8x256xf32>
    %c2_50 = arith.constant 2 : index
    %c0_51 = arith.constant 0 : index
    %c0_52 = arith.constant 0 : index
    %87 = vector.load %arg4[%c2_50, %c0_51, %c0_52] : memref<8x1x256xf32, #tpu.memory_space<vmem>>, vector<1x1x256xf32>
    %88 = vector.shape_cast %87 : vector<1x1x256xf32> to vector<1x256xf32>
    %89 = vector.broadcast %88 : vector<1x256xf32> to vector<8x256xf32>
    %90 = arith.mulf %86, %89 : vector<8x256xf32>
    %c255_i32_53 = arith.constant 255 : i32
    %91 = tpu.dynamic_rotate %3 by %c255_i32_53 dim 1 : vector<8x256xf32>, i32 -> vector<8x256xf32>
    %c3_54 = arith.constant 3 : index
    %c0_55 = arith.constant 0 : index
    %c0_56 = arith.constant 0 : index
    %92 = vector.load %arg4[%c3_54, %c0_55, %c0_56] : memref<8x1x256xf32, #tpu.memory_space<vmem>>, vector<1x1x256xf32>
    %93 = vector.shape_cast %92 : vector<1x1x256xf32> to vector<1x256xf32>
    %94 = vector.broadcast %93 : vector<1x256xf32> to vector<8x256xf32>
    %95 = arith.mulf %91, %94 : vector<8x256xf32>
    %96 = tpu.concatenate %90, %3, %95 in 0 : vector<8x256xf32>, vector<8x256xf32>, vector<8x256xf32> -> vector<24x256xf32>
    %c4_57 = arith.constant 4 : index
    %c0_58 = arith.constant 0 : index
    %c0_59 = arith.constant 0 : index
    %97 = vector.load %arg2[%c4_57, %c0_58, %c0_59] : memref<8x8x24xbf16, #tpu.memory_space<vmem>>, vector<1x8x24xbf16>
    %98 = vector.shape_cast %97 : vector<1x8x24xbf16> to vector<8x24xbf16>
    %99 = arith.truncf %96 : vector<24x256xf32> to vector<24x256xbf16>
    %cst_60 = arith.constant dense<0.000000e+00> : vector<8x256xf32>
    %100 = tpu.matmul %98, %99, %cst_60 {dimension_numbers = #tpu.dot_dimension_numbers<[1], [0], [0], [1], [0, 0, 1, 1], [], []>} : vector<8x24xbf16>, vector<24x256xbf16>, vector<8x256xf32> -> vector<8x256xf32>
    %c4_61 = arith.constant 4 : index
    %c0_62 = arith.constant 0 : index
    %c0_63 = arith.constant 0 : index
    %101 = vector.load %arg3[%c4_61, %c0_62, %c0_63] : memref<8x8x1xf32, #tpu.memory_space<vmem>>, vector<1x8x1xf32>
    %102 = vector.shape_cast %101 : vector<1x8x1xf32> to vector<8x1xf32>
    %103 = vector.broadcast %102 : vector<8x1xf32> to vector<8x256xf32>
    %104 = arith.addf %100, %103 : vector<8x256xf32>
    %cst_64 = arith.constant 0.000000e+00 : f32
    %105 = vector.broadcast %cst_64 : f32 to vector<8x256xf32>
    %106 = arith.maximumf %104, %105 : vector<8x256xf32>
    %c16_i32_65 = arith.constant 16 : i32
    %107 = tpu.dynamic_rotate %106 by %c16_i32_65 dim 1 : vector<8x256xf32>, i32 -> vector<8x256xf32>
    %c0_66 = arith.constant 0 : index
    %c0_67 = arith.constant 0 : index
    %c0_68 = arith.constant 0 : index
    %108 = vector.load %arg4[%c0_66, %c0_67, %c0_68] : memref<8x1x256xf32, #tpu.memory_space<vmem>>, vector<1x1x256xf32>
    %109 = vector.shape_cast %108 : vector<1x1x256xf32> to vector<1x256xf32>
    %110 = vector.broadcast %109 : vector<1x256xf32> to vector<8x256xf32>
    %111 = arith.mulf %107, %110 : vector<8x256xf32>
    %c240_i32_69 = arith.constant 240 : i32
    %112 = tpu.dynamic_rotate %106 by %c240_i32_69 dim 1 : vector<8x256xf32>, i32 -> vector<8x256xf32>
    %c1_70 = arith.constant 1 : index
    %c0_71 = arith.constant 0 : index
    %c0_72 = arith.constant 0 : index
    %113 = vector.load %arg4[%c1_70, %c0_71, %c0_72] : memref<8x1x256xf32, #tpu.memory_space<vmem>>, vector<1x1x256xf32>
    %114 = vector.shape_cast %113 : vector<1x1x256xf32> to vector<1x256xf32>
    %115 = vector.broadcast %114 : vector<1x256xf32> to vector<8x256xf32>
    %116 = arith.mulf %112, %115 : vector<8x256xf32>
    %117 = tpu.concatenate %111, %106, %116 in 0 : vector<8x256xf32>, vector<8x256xf32>, vector<8x256xf32> -> vector<24x256xf32>
    %c5_73 = arith.constant 5 : index
    %c0_74 = arith.constant 0 : index
    %c0_75 = arith.constant 0 : index
    %118 = vector.load %arg2[%c5_73, %c0_74, %c0_75] : memref<8x8x24xbf16, #tpu.memory_space<vmem>>, vector<1x8x24xbf16>
    %119 = vector.shape_cast %118 : vector<1x8x24xbf16> to vector<8x24xbf16>
    %120 = arith.truncf %117 : vector<24x256xf32> to vector<24x256xbf16>
    %cst_76 = arith.constant dense<0.000000e+00> : vector<8x256xf32>
    %121 = tpu.matmul %119, %120, %cst_76 {dimension_numbers = #tpu.dot_dimension_numbers<[1], [0], [0], [1], [0, 0, 1, 1], [], []>} : vector<8x24xbf16>, vector<24x256xbf16>, vector<8x256xf32> -> vector<8x256xf32>
    %c5_77 = arith.constant 5 : index
    %c0_78 = arith.constant 0 : index
    %c0_79 = arith.constant 0 : index
    %122 = vector.load %arg3[%c5_77, %c0_78, %c0_79] : memref<8x8x1xf32, #tpu.memory_space<vmem>>, vector<1x8x1xf32>
    %123 = vector.shape_cast %122 : vector<1x8x1xf32> to vector<8x1xf32>
    %124 = vector.broadcast %123 : vector<8x1xf32> to vector<8x256xf32>
    %125 = arith.addf %121, %124 : vector<8x256xf32>
    %cst_80 = arith.constant 0.000000e+00 : f32
    %126 = vector.broadcast %cst_80 : f32 to vector<8x256xf32>
    %127 = arith.maximumf %125, %126 : vector<8x256xf32>
    %c2_i32_81 = arith.constant 2 : i32
    %128 = tpu.dynamic_rotate %127 by %c2_i32_81 dim 1 : vector<8x256xf32>, i32 -> vector<8x256xf32>
    %c6_82 = arith.constant 6 : index
    %c0_83 = arith.constant 0 : index
    %c0_84 = arith.constant 0 : index
    %129 = vector.load %arg4[%c6_82, %c0_83, %c0_84] : memref<8x1x256xf32, #tpu.memory_space<vmem>>, vector<1x1x256xf32>
    %130 = vector.shape_cast %129 : vector<1x1x256xf32> to vector<1x256xf32>
    %131 = vector.broadcast %130 : vector<1x256xf32> to vector<8x256xf32>
    %132 = arith.mulf %128, %131 : vector<8x256xf32>
    %c254_i32_85 = arith.constant 254 : i32
    %133 = tpu.dynamic_rotate %127 by %c254_i32_85 dim 1 : vector<8x256xf32>, i32 -> vector<8x256xf32>
    %c7_86 = arith.constant 7 : index
    %c0_87 = arith.constant 0 : index
    %c0_88 = arith.constant 0 : index
    %134 = vector.load %arg4[%c7_86, %c0_87, %c0_88] : memref<8x1x256xf32, #tpu.memory_space<vmem>>, vector<1x1x256xf32>
    %135 = vector.shape_cast %134 : vector<1x1x256xf32> to vector<1x256xf32>
    %136 = vector.broadcast %135 : vector<1x256xf32> to vector<8x256xf32>
    %137 = arith.mulf %133, %136 : vector<8x256xf32>
    %138 = tpu.concatenate %132, %127, %137 in 0 : vector<8x256xf32>, vector<8x256xf32>, vector<8x256xf32> -> vector<24x256xf32>
    %c6_89 = arith.constant 6 : index
    %c0_90 = arith.constant 0 : index
    %c0_91 = arith.constant 0 : index
    %139 = vector.load %arg2[%c6_89, %c0_90, %c0_91] : memref<8x8x24xbf16, #tpu.memory_space<vmem>>, vector<1x8x24xbf16>
    %140 = vector.shape_cast %139 : vector<1x8x24xbf16> to vector<8x24xbf16>
    %141 = arith.truncf %138 : vector<24x256xf32> to vector<24x256xbf16>
    %cst_92 = arith.constant dense<0.000000e+00> : vector<8x256xf32>
    %142 = tpu.matmul %140, %141, %cst_92 {dimension_numbers = #tpu.dot_dimension_numbers<[1], [0], [0], [1], [0, 0, 1, 1], [], []>} : vector<8x24xbf16>, vector<24x256xbf16>, vector<8x256xf32> -> vector<8x256xf32>
    %c6_93 = arith.constant 6 : index
    %c0_94 = arith.constant 0 : index
    %c0_95 = arith.constant 0 : index
    %143 = vector.load %arg3[%c6_93, %c0_94, %c0_95] : memref<8x8x1xf32, #tpu.memory_space<vmem>>, vector<1x8x1xf32>
    %144 = vector.shape_cast %143 : vector<1x8x1xf32> to vector<8x1xf32>
    %145 = vector.broadcast %144 : vector<8x1xf32> to vector<8x256xf32>
    %146 = arith.addf %142, %145 : vector<8x256xf32>
    %cst_96 = arith.constant 0.000000e+00 : f32
    %147 = vector.broadcast %cst_96 : f32 to vector<8x256xf32>
    %148 = arith.maximumf %146, %147 : vector<8x256xf32>
    %c32_i32_97 = arith.constant 32 : i32
    %149 = tpu.dynamic_rotate %148 by %c32_i32_97 dim 1 : vector<8x256xf32>, i32 -> vector<8x256xf32>
    %c4_98 = arith.constant 4 : index
    %c0_99 = arith.constant 0 : index
    %c0_100 = arith.constant 0 : index
    %150 = vector.load %arg4[%c4_98, %c0_99, %c0_100] : memref<8x1x256xf32, #tpu.memory_space<vmem>>, vector<1x1x256xf32>
    %151 = vector.shape_cast %150 : vector<1x1x256xf32> to vector<1x256xf32>
    %152 = vector.broadcast %151 : vector<1x256xf32> to vector<8x256xf32>
    %153 = arith.mulf %149, %152 : vector<8x256xf32>
    %c224_i32_101 = arith.constant 224 : i32
    %154 = tpu.dynamic_rotate %148 by %c224_i32_101 dim 1 : vector<8x256xf32>, i32 -> vector<8x256xf32>
    %c5_102 = arith.constant 5 : index
    %c0_103 = arith.constant 0 : index
    %c0_104 = arith.constant 0 : index
    %155 = vector.load %arg4[%c5_102, %c0_103, %c0_104] : memref<8x1x256xf32, #tpu.memory_space<vmem>>, vector<1x1x256xf32>
    %156 = vector.shape_cast %155 : vector<1x1x256xf32> to vector<1x256xf32>
    %157 = vector.broadcast %156 : vector<1x256xf32> to vector<8x256xf32>
    %158 = arith.mulf %154, %157 : vector<8x256xf32>
    %159 = tpu.concatenate %153, %148, %158 in 0 : vector<8x256xf32>, vector<8x256xf32>, vector<8x256xf32> -> vector<24x256xf32>
    %c7_105 = arith.constant 7 : index
    %c0_106 = arith.constant 0 : index
    %c0_107 = arith.constant 0 : index
    %160 = vector.load %arg2[%c7_105, %c0_106, %c0_107] : memref<8x8x24xbf16, #tpu.memory_space<vmem>>, vector<1x8x24xbf16>
    %161 = vector.shape_cast %160 : vector<1x8x24xbf16> to vector<8x24xbf16>
    %162 = arith.truncf %159 : vector<24x256xf32> to vector<24x256xbf16>
    %cst_108 = arith.constant dense<0.000000e+00> : vector<8x256xf32>
    %163 = tpu.matmul %161, %162, %cst_108 {dimension_numbers = #tpu.dot_dimension_numbers<[1], [0], [0], [1], [0, 0, 1, 1], [], []>} : vector<8x24xbf16>, vector<24x256xbf16>, vector<8x256xf32> -> vector<8x256xf32>
    %c7_109 = arith.constant 7 : index
    %c0_110 = arith.constant 0 : index
    %c0_111 = arith.constant 0 : index
    %164 = vector.load %arg3[%c7_109, %c0_110, %c0_111] : memref<8x8x1xf32, #tpu.memory_space<vmem>>, vector<1x8x1xf32>
    %165 = vector.shape_cast %164 : vector<1x8x1xf32> to vector<8x1xf32>
    %166 = vector.broadcast %165 : vector<8x1xf32> to vector<8x256xf32>
    %167 = arith.addf %163, %166 : vector<8x256xf32>
    %168 = arith.addf %2, %85 : vector<8x256xf32>
    %cst_112 = arith.constant 0.000000e+00 : f32
    %169 = vector.broadcast %cst_112 : f32 to vector<8x256xf32>
    %170 = arith.maximumf %168, %169 : vector<8x256xf32>
    %171 = arith.addf %3, %167 : vector<8x256xf32>
    %cst_113 = arith.constant 0.000000e+00 : f32
    %172 = vector.broadcast %cst_113 : f32 to vector<8x256xf32>
    %173 = arith.maximumf %171, %172 : vector<8x256xf32>
    %174 = tpu.concatenate %170, %173 in 0 : vector<8x256xf32>, vector<8x256xf32> -> vector<16x256xf32>
    %c0_114 = arith.constant 0 : index
    %c0_115 = arith.constant 0 : index
    %175 = vector.load %arg5[%c0_114, %c0_115] : memref<16x16xf32, #tpu.memory_space<vmem>>, vector<16x16xf32>
    %cst_116 = arith.constant dense<0.000000e+00> : vector<16x256xf32>
    %176 = tpu.matmul %175, %174, %cst_116 {dimension_numbers = #tpu.dot_dimension_numbers<[1], [0], [0], [1], [0, 0, 1, 1], [], []>} : vector<16x16xf32>, vector<16x256xf32>, vector<16x256xf32> -> vector<16x256xf32>
    %c0_117 = arith.constant 0 : index
    %c0_118 = arith.constant 0 : index
    %c0_119 = arith.constant 0 : index
    %177 = vector.load %arg6[%c0_117, %c0_118, %c0_119] : memref<1x16x256xf32, #tpu.memory_space<vmem>>, vector<1x16x256xf32>
    %178 = vector.shape_cast %177 : vector<1x16x256xf32> to vector<16x256xf32>
    %179 = vector.shape_cast %176 : vector<16x256xf32> to vector<1x16x256xf32>
    tpu.vector_store %arg6[%c0_117, %c0_118, %c0_119], %179 {strides = array<i32>} : memref<1x16x256xf32, #tpu.memory_space<vmem>>, vector<1x16x256xf32>,
    return
  }
  func.func @transform_0(%arg0: i32) -> (i32, i32, i32) {
    %c0_i32 = arith.constant 0 : i32
    %c0_i32_0 = arith.constant 0 : i32
    %c0_i32_1 = arith.constant 0 : i32
    return %arg0, %c0_i32, %c0_i32_0 : i32, i32, i32
  }
  func.func @transform_1(%arg0: i32) -> (i32, i32, i32) {
    %c0_i32 = arith.constant 0 : i32
    %c0_i32_0 = arith.constant 0 : i32
    %c0_i32_1 = arith.constant 0 : i32
    %c0_i32_2 = arith.constant 0 : i32
    return %c0_i32, %c0_i32_0, %c0_i32_1 : i32, i32, i32
  }
  func.func @transform_2(%arg0: i32) -> (i32, i32, i32) {
    %c0_i32 = arith.constant 0 : i32
    %c0_i32_0 = arith.constant 0 : i32
    %c0_i32_1 = arith.constant 0 : i32
    %c0_i32_2 = arith.constant 0 : i32
    return %c0_i32, %c0_i32_0, %c0_i32_1 : i32, i32, i32
  }
  func.func @transform_3(%arg0: i32) -> (i32, i32, i32) {
    %c0_i32 = arith.constant 0 : i32
    %c0_i32_0 = arith.constant 0 : i32
    %c0_i32_1 = arith.constant 0 : i32
    %c0_i32_2 = arith.constant 0 : i32
    return %c0_i32, %c0_i32_0, %c0_i32_1 : i32, i32, i32
  }
  func.func @transform_4(%arg0: i32) -> (i32, i32) {
    %c0_i32 = arith.constant 0 : i32
    %c0_i32_0 = arith.constant 0 : i32
    %c0_i32_1 = arith.constant 0 : i32
    return %c0_i32, %c0_i32_0 : i32, i32
  }
  func.func @transform_5(%arg0: i32) -> (i32, i32, i32) {
    %c0_i32 = arith.constant 0 : i32
    %c0_i32_0 = arith.constant 0 : i32
    %c0_i32_1 = arith.constant 0 : i32
    return %arg0, %c0_i32, %c0_i32_0 : i32, i32, i32
  }
}

</mosaic_0001>

<llo_original>
// kernel: tpu_custom_call.1
$region0: #{tpu_custom_call.1}
  #allocation0 [shape = 'u32[]', space=smem, size = 0x4, offset = 0x4, fixed_abs, tag = 'smem constant byte address 0x4 - core index']
  #allocation1 [shape = 'u32[144,128]{1,0:T(1,128)}', space=vmem, size = 0x12000, scoped, tag = 'internal scratch']
  %s0 = inlined_call_operand.vmem [shape: f32[2,16,256], index: 0, kind: input, shape index: {}]
  %s1 = inlined_call_operand.hbm [shape: bf16[8,8,24], index: 1, kind: input, shape index: {}]
  %s2 = inlined_call_operand.vmem [shape: f32[8,8,1], index: 2, kind: input, shape index: {}]
  %s3 = inlined_call_operand.hbm [shape: f32[8,1,256], index: 3, kind: input, shape index: {}]
  %s4 = inlined_call_operand.hbm [shape: f32[16,16], index: 4, kind: input, shape index: {}]
  %s5 = inlined_call_operand.hbm [shape: f32[2,16,256], index: 5, kind: output, shape index: {}]
  %s6 = sld [smem:[#allocation0]]
  $region65: #{tpu_custom_call.1} parent=0
    _
  %s8 = ssub.s32 1, %s6
  %s9 = scalar_select 0, %s8, %s6
  $region1: #{tpu_custom_call.1} parent=0
    #allocation2 [shape = 'u8[16384]{0}', space=vmem, size = 0x4000, scoped, tag = 'input window, operand 1, single buffered']
    #allocation3 [shape = 's32[2]{0}', space=sflag, size = 0x8, scoped, tag = 'scoped memory for tpu_custom_call.1']
    #allocation4 [shape = 's32[2]{0}', space=sflag, size = 0x8, scoped, tag = 'scoped memory for tpu_custom_call.1']
    #allocation5 [shape = 'u8[8192]{0}', space=vmem, size = 0x2000, scoped, tag = 'input window, operand 3, single buffered']
    #allocation6 [shape = 's32[1]{0}', space=sflag, size = 0x4, scoped, tag = 'scoped memory for tpu_custom_call.1']
    #allocation7 [shape = 'u8[8192]{0}', space=vmem, size = 0x2000, scoped, tag = 'input window, operand 4, single buffered']
    #allocation8 [shape = 'u8[32768]{0}', space=vmem, size = 0x8000, scoped, tag = 'output window, operand 0']
    %10 = vsyncpa [#allocation3], 0
    %11 = vsyncpa [#allocation6], 0
    %12 = vsyncpa [#allocation4], 0
    %s13 = scalar_lea.sflag [#allocation4], 1
    %14 = vsyncpa %s13, 0
    loop: start=0, step=1, limit=4
    $region2: #{tpu_custom_call.1} parent=1 // loop_pre_header
      _
    $region3: #{tpu_custom_call.1} parent=1 // loop_header
      %s16 = sphi 0, %s20
      %p17 = scmp.ge.s32.totalorder %s16, 4
      %s26 = sphi 0, %s28
      %s29 = sphi 0, %s26
      %s30 = sphi 0, %s29
      %s46 = sphi 0, %s30
      %s50 = sphi 0, %s50
      %s52 = sphi 0, %s50
      %s53 = sphi 0, %s52
      %s67 = sphi 0, %s53
      %s71 = sphi 0, %s71
      %s73 = sphi 0, %s71
      %s74 = sphi 0, %s73
      %s88 = sphi 0, %s74
      %s92 = sphi 0, %s92
      %s94 = sphi 0, %s92
      %s95 = sphi 0, %s94
      %s109 = sphi 0, %s95
      %s113 = sphi 0, %s113
      %s115 = sphi 0, %s113
      %s116 = sphi 0, %s115
      %s130 = sphi 0, %s116
      %s136 = sphi 0, %s138
      %s139 = sphi 0, %s136
      %s140 = sphi 0, %s139
      %s156 = sphi 0, %s140
    $region4: #{tpu_custom_call.1} parent=1 // loop_header_branch
      %19 = sbr.rel (%p17) target = $region8
    $region5: #{tpu_custom_call.1} parent=1 // loop_body
      %s21 = ssub.s32 %s16, 1
      %s22 = ssub.s32 %s16, 2
      %s23 = sadd.s32 %s16, 1
      %s24 = ssub.s32 %s16, %s23
      %p25 = scmp.eq.s32.totalorder %s24, 0
      %s27 = sadd.s32 %s26, 1
      %s28 = scalar_select %p25, %s26, %s27
      %p31 = pneg %p25
      %p32 = scmp.eq.s32.totalorder %s16, 1
      %p33 = por %p31, %p32
      %p34 = scmp.ne.s32.totalorder %s26, %s29
      %p35 = scmp.eq.s32.totalorder %s16, 0
      %p36 = por %p34, %p35
      %p37 = scmp.ne.s32.totalorder %s26, %s29
      %p38 = scmp.eq.s32.totalorder %s21, 1
      %p39 = por %p37, %p38
      %p40 = scmp.ne.s32.totalorder %s29, %s30
      %p41 = scmp.eq.s32.totalorder %s21, 0
      %p42 = por %p40, %p41
      %p43 = scmp.ne.s32.totalorder %s29, %s30
      %p44 = scmp.eq.s32.totalorder %s22, 1
      %p45 = por %p43, %p44
      %p47 = scmp.ne.s32.totalorder %s30, %s46
      %p48 = scmp.eq.s32.totalorder %s22, 0
      %p49 = por %p47, %p48
      %s51 = sadd.s32 %s50, 1
      %p54 = scmp.eq.s32.totalorder %s16, 1
      %p55 = scmp.ne.s32.totalorder %s50, %s52
      %p56 = scmp.eq.s32.totalorder %s16, 0
      %p57 = por %p55, %p56
      %p58 = scmp.ne.s32.totalorder %s50, %s52
      %p59 = scmp.eq.s32.totalorder %s21, 1
      %p60 = por %p58, %p59
      %p61 = scmp.ne.s32.totalorder %s52, %s53
      %p62 = scmp.eq.s32.totalorder %s21, 0
      %p63 = por %p61, %p62
      %p64 = scmp.ne.s32.totalorder %s52, %s53
      %p65 = scmp.eq.s32.totalorder %s22, 1
      %p66 = por %p64, %p65
      %p68 = scmp.ne.s32.totalorder %s53, %s67
      %p69 = scmp.eq.s32.totalorder %s22, 0
      %p70 = por %p68, %p69
      %s72 = sadd.s32 %s71, 1
      %p75 = scmp.eq.s32.totalorder %s16, 1
      %p76 = scmp.ne.s32.totalorder %s71, %s73
      %p77 = scmp.eq.s32.totalorder %s16, 0
      %p78 = por %p76, %p77
      %p79 = scmp.ne.s32.totalorder %s71, %s73
      %p80 = scmp.eq.s32.totalorder %s21, 1
      %p81 = por %p79, %p80
      %p82 = scmp.ne.s32.totalorder %s73, %s74
      %p83 = scmp.eq.s32.totalorder %s21, 0
      %p84 = por %p82, %p83
      %p85 = scmp.ne.s32.totalorder %s73, %s74
      %p86 = scmp.eq.s32.totalorder %s22, 1
      %p87 = por %p85, %p86
      %p89 = scmp.ne.s32.totalorder %s74, %s88
      %p90 = scmp.eq.s32.totalorder %s22, 0
      %p91 = por %p89, %p90
      %s93 = sadd.s32 %s92, 1
      %p96 = scmp.eq.s32.totalorder %s16, 1
      %p97 = scmp.ne.s32.totalorder %s92, %s94
      %p98 = scmp.eq.s32.totalorder %s16, 0
      %p99 = por %p97, %p98
      %p100 = scmp.ne.s32.totalorder %s92, %s94
      %p101 = scmp.eq.s32.totalorder %s21, 1
      %p102 = por %p100, %p101
      %p103 = scmp.ne.s32.totalorder %s94, %s95
      %p104 = scmp.eq.s32.totalorder %s21, 0
      %p105 = por %p103, %p104
      %p106 = scmp.ne.s32.totalorder %s94, %s95
      %p107 = scmp.eq.s32.totalorder %s22, 1
      %p108 = por %p106, %p107
      %p110 = scmp.ne.s32.totalorder %s95, %s109
      %p111 = scmp.eq.s32.totalorder %s22, 0
      %p112 = por %p110, %p111
      %s114 = sadd.s32 %s113, 1
      %p117 = scmp.eq.s32.totalorder %s16, 1
      %p118 = scmp.ne.s32.totalorder %s113, %s115
      %p119 = scmp.eq.s32.totalorder %s16, 0
      %p120 = por %p118, %p119
      %p121 = scmp.ne.s32.totalorder %s113, %s115
      %p122 = scmp.eq.s32.totalorder %s21, 1
      %p123 = por %p121, %p122
      %p124 = scmp.ne.s32.totalorder %s115, %s116
      %p125 = scmp.eq.s32.totalorder %s21, 0
      %p126 = por %p124, %p125
      %p127 = scmp.ne.s32.totalorder %s115, %s116
      %p128 = scmp.eq.s32.totalorder %s22, 1
      %p129 = por %p127, %p128
      %p131 = scmp.ne.s32.totalorder %s116, %s130
      %p132 = scmp.eq.s32.totalorder %s22, 0
      %p133 = por %p131, %p132
      %s134 = ssub.s32 %s16, %s23
      %p135 = scmp.eq.s32.totalorder %s134, 0
      %s137 = sadd.s32 %s136, 1
      %s138 = scalar_select %p135, %s136, %s137
      %p141 = pneg %p135
      %p142 = scmp.eq.s32.totalorder %s16, 1
      %p143 = por %p141, %p142
      %p144 = scmp.ne.s32.totalorder %s136, %s139
      %p145 = scmp.eq.s32.totalorder %s16, 0
      %p146 = por %p144, %p145
      %p147 = scmp.ne.s32.totalorder %s136, %s139
      %p148 = scmp.eq.s32.totalorder %s21, 1
      %p149 = por %p147, %p148
      %p150 = scmp.ne.s32.totalorder %s139, %s140
      %p151 = scmp.eq.s32.totalorder %s21, 0
      %p152 = por %p150, %p151
      %p153 = scmp.ne.s32.totalorder %s139, %s140
      %p154 = scmp.eq.s32.totalorder %s22, 1
      %p155 = por %p153, %p154
      %p157 = scmp.ne.s32.totalorder %s140, %s156
      %p158 = scmp.eq.s32.totalorder %s22, 0
      %p159 = por %p157, %p158
      %p160 = scmp.le.s32.totalorder 1, %s16
      %p161 = scmp.lt.s32.totalorder %s16, 3
      %p162 = pnand %p160, %p161
      %p163 = pneg %p162
      // Predicated region
      $region9: #{tpu_custom_call.1} parent=5 // pred_check
        _
      $region10: #{tpu_custom_call.1} parent=5 // pred_check_branch
        %165 = sbr.rel (%p162) target = $region12
      $region11: #{tpu_custom_call.1} parent=5 // pred_region
        %s166 = ssub.s32 %s16, 1
        // Predicated region
        $region13: #{tpu_custom_call.1} parent=11 // pred_check
          %p167 = pneg %p63
        $region14: #{tpu_custom_call.1} parent=11 // pred_check_branch
          %169 = sbr.rel (%p167) target = $region16
        $region15: #{tpu_custom_call.1} parent=11 // pred_region
          %s171 = ssub.s32 512, 512
          %172 = vsyncadd [#allocation3], %s171
          %s173 = sshll.u32 [#allocation2], 4
          %s174 = int_to_ptr.vmem [resolvable:$true] %s173
          %179 = dma.hbm_to_vmem [thread:$0]  %s1, 512, %s174, [#allocation3], 64, 64, 4
        $region16: #{tpu_custom_call.1} parent=11 // pred_fallthru
          _
        // Predicated region
        $region17: #{tpu_custom_call.1} parent=11 // pred_check
          %p180 = pneg %p84
        $region18: #{tpu_custom_call.1} parent=11 // pred_check_branch
          %182 = sbr.rel (%p180) target = $region20
        $region19: #{tpu_custom_call.1} parent=11 // pred_region
          _
        $region20: #{tpu_custom_call.1} parent=11 // pred_fallthru
          _
        // Predicated region
        $region21: #{tpu_custom_call.1} parent=11 // pred_check
          %p183 = pneg %p105
        $region22: #{tpu_custom_call.1} parent=11 // pred_check_branch
          %185 = sbr.rel (%p183) target = $region24
        $region23: #{tpu_custom_call.1} parent=11 // pred_region
          %s187 = ssub.s32 256, 256
          %188 = vsyncadd [#allocation6], %s187
          %s189 = sshll.u32 [#allocation5], 4
          %s190 = int_to_ptr.vmem [resolvable:$true] %s189
          %195 = dma.hbm_to_vmem [thread:$0]  %s3, 256, %s190, [#allocation6], 32, 32, 2
        $region24: #{tpu_custom_call.1} parent=11 // pred_fallthru
          _
        // Predicated region
        $region25: #{tpu_custom_call.1} parent=11 // pred_check
          %p196 = pneg %p126
        $region26: #{tpu_custom_call.1} parent=11 // pred_check_branch
          %198 = sbr.rel (%p196) target = $region28
        $region27: #{tpu_custom_call.1} parent=11 // pred_region
          %s200 = ssub.s32 256, 256
          %201 = vsyncadd [#allocation6], %s200
          %s202 = sshll.u32 [#allocation7], 4
          %s203 = int_to_ptr.vmem [resolvable:$true] %s202
          %208 = dma.hbm_to_vmem [thread:$0]  %s4, 256, %s203, [#allocation6], 128, 128, 8
        $region28: #{tpu_custom_call.1} parent=11 // pred_fallthru
          _
      $region12: #{tpu_custom_call.1} parent=5 // pred_fallthru
        _
      %p209 = scmp.lt.s32.totalorder %s16, 2
      // Predicated region
      $region29: #{tpu_custom_call.1} parent=5 // pred_check
        %p210 = pneg %p209
      $region30: #{tpu_custom_call.1} parent=5 // pred_check_branch
        %212 = sbr.rel (%p210) target = $region32
      $region31: #{tpu_custom_call.1} parent=5 // pred_region
        // Predicated region
        $region33: #{tpu_custom_call.1} parent=31 // pred_check
          %p213 = pneg %p36
        $region34: #{tpu_custom_call.1} parent=31 // pred_check_branch
          %215 = sbr.rel (%p213) target = $region36
        $region35: #{tpu_custom_call.1} parent=31 // pred_region
          %p216 = scmp.lt.s32.totalorder %s16, 1
          %s217 = scalar_select %p216, %s16, 1
          %s218 = smul.addr %s217, 4
          %s219 = smul.addr %s218, 8
          %s220 = scalar_lea.vmem %s0, %s219
        $region36: #{tpu_custom_call.1} parent=31 // pred_fallthru
          _
      $region32: #{tpu_custom_call.1} parent=5 // pred_fallthru
        _
      %p221 = scmp.le.s32.totalorder 1, %s16
      %p222 = scmp.lt.s32.totalorder %s16, 3
      %p223 = pnand %p221, %p222
      %p224 = pneg %p223
      // Predicated region
      $region37: #{tpu_custom_call.1} parent=5 // pred_check
        _
      $region38: #{tpu_custom_call.1} parent=5 // pred_check_branch
        %226 = sbr.rel (%p223) target = $region40
      $region39: #{tpu_custom_call.1} parent=5 // pred_region
        %s227 = ssub.s32 %s16, 1
        // Predicated region
        $region41: #{tpu_custom_call.1} parent=39 // pred_check
          %p228 = pneg %p63
        $region42: #{tpu_custom_call.1} parent=39 // pred_check_branch
          %230 = sbr.rel (%p228) target = $region44
        $region43: #{tpu_custom_call.1} parent=39 // pred_region
          %231 = dma.done [#allocation3], 512
        $region44: #{tpu_custom_call.1} parent=39 // pred_fallthru
          _
        // Predicated region
        $region45: #{tpu_custom_call.1} parent=39 // pred_check
          %p232 = pneg %p105
        $region46: #{tpu_custom_call.1} parent=39 // pred_check_branch
          %234 = sbr.rel (%p232) target = $region48
        $region47: #{tpu_custom_call.1} parent=39 // pred_region
          %235 = dma.done [#allocation6], 256
        $region48: #{tpu_custom_call.1} parent=39 // pred_fallthru
          _
        // Predicated region
        $region49: #{tpu_custom_call.1} parent=39 // pred_check
          %p236 = pneg %p126
        $region50: #{tpu_custom_call.1} parent=39 // pred_check_branch
          %238 = sbr.rel (%p236) target = $region52
        $region51: #{tpu_custom_call.1} parent=39 // pred_region
          %239 = dma.done [#allocation6], 256
        $region52: #{tpu_custom_call.1} parent=39 // pred_fallthru
          _
        %p240 = scmp.lt.s32.totalorder %s21, 1
        %s241 = scalar_select %p240, %s21, 1
        %s242 = smul.addr %s241, 4
        %s243 = smul.addr %s242, 8
        %s244 = scalar_lea.vmem %s0, %s243
        %p245 = pneg %p42
        %p246 = pneg %p39
        %p247 = pneg %p63
        %p248 = pneg %p60
        %p249 = pneg %p84
        %p250 = pneg %p81
        %p251 = pneg %p105
        %p252 = pneg %p102
        %p253 = pneg %p126
        %p254 = pneg %p123
        %p255 = pneg %p152
        %p256 = pneg %p149
        %s257 = sand.u32 %s139, 1
        %s258 = scalar_lea.sflag [#allocation4], %s257
        %s259 = sand.u32 %s139, 1
        %s260 = smul.addr %s259, 32
        %s261 = scalar_lea.vmem [#allocation8], %s260
        %p262 = scmp.lt.s32.totalorder %s21, 1
        %s263 = scalar_select %p262, %s21, 1
        %s264 = smul.addr %s263, 4
        %s265 = smul.addr %s264, 8
        %s266 = scalar_lea.vmem %s0, %s265
        %v268 = vld [vmem:[%s266] sm:$0xff]
        %v269 = vld [vmem:[%s266 + $0x8] sm:$0xff]
        %v270 = vld [vmem:[%s266 + $0x10] sm:$0xff]
        %v271 = vld [vmem:[%s266 + $0x18] sm:$0xff]
        %272 = vrot.lane.b32.xlu0 %v268, 16
        %v273 = vpop.permute.xlu0 %272
        %274 = vrot.lane.b32.xlu0 %v269, 16
        %v275 = vpop.permute.xlu0 %274
        %v276 = vlaneseq
        %v277 = vand.u32 %v276, 127
        %vm278 = vcmp.lt.s32.totalorder %v277, 16
        %v279 = vsel %vm278, %v273, %v275
        %v280 = vsel %vm278, %v275, %v273
        %v281 = vld [vmem:[#allocation5] sm:$0x3]
        %v283 = vlaneseq
        %v284 = vshrl.u32 %v283, 7
        %v285 = vsub.s32 0, %v284
        %v286 = vrot.slane %v281, %v285
        %v287 = vlaneseq
        %v288 = vshrl.u32 %v287, 7
        %v289 = vsub.s32 1, %v288
        %v290 = vrot.slane %v281, %v289
        %v293 = vmul.f32 %v280, %v286
        %v294 = vmul.f32 %v279, %v290
        %295 = vrot.lane.b32.xlu0 %v268, 112
        %v296 = vpop.permute.xlu0 %295
        %297 = vrot.lane.b32.xlu0 %v269, 112
        %v298 = vpop.permute.xlu0 %297
        %vm299 = vcmp.lt.s32.totalorder %v277, 112
        %v300 = vsel %vm299, %v296, %v298
        %v301 = vsel %vm299, %v298, %v296
        %s302 = scalar_lea.vmem [#allocation5], 2
        %v303 = vld [vmem:[%s302] sm:$0x3]
        %v305 = vlaneseq
        %v306 = vshrl.u32 %v305, 7
        %v307 = vsub.s32 0, %v306
        %v308 = vrot.slane %v303, %v307
        %v309 = vlaneseq
        %v310 = vshrl.u32 %v309, 7
        %v311 = vsub.s32 1, %v310
        %v312 = vrot.slane %v303, %v311
        %v315 = vmul.f32 %v300, %v308
        %v316 = vmul.f32 %v301, %v312
        %v317 = vld [vmem:[#allocation2] sm:$0xf]
        %v318 = vpack.c.bf16 %v268, %v293
        %v319 = vpack.c.bf16 %v269, %v294
        %v320 = vpack.c.bf16 %v315, %v315
        %v321 = vpack.c.bf16 %v316, %v316
        %v322 = vld [vmem:[%s2] sm:$0xff]
        %324 = vset.pattern.permute.xlu0 0
        %325 = vperm.xlu0 %324, %v322
        %v326 = vpop.permute.xlu0 %325
        %vm328 = vcmask 195584
        %v330 = vsel %vm328, %v317, 0
        %vm332 = vcmask 1043456
        %v334 = vsel %vm332, %v320, 0
        %v337 = vsel %vm332, %v321, 0
        %339 = vmatprep.subr.bf16.mxu0 0
        %340 = vmatpush1.bf16.msra.mxu0 0
        %341 = vmatprep.subr.bf16.mxu0 0
        %342 = vmatpush1.bf16.msra.mxu0 0
        %343 = vmatprep.subr.bf16.mxu0 0
        %344 = vmatpush1.bf16.msra.mxu0 0
        %345 = vmatprep.subr.bf16.mxu0 0
        %346 = vmatpush1.bf16.msra.mxu0 0
        %347 = vmatprep.subr.bf16.mxu0 0
        %348 = vmatpush1.bf16.msra.mxu0 0
        %349 = vmatprep.subr.bf16.mxu0 0
        %350 = vmatpush1.bf16.msra.mxu0 0
        %351 = vmatprep.subr.bf16.mxu0 %v337
        %352 = vmatpush1.bf16.msra.mxu0 %v334
        %353 = vmatprep.subr.bf16.mxu0 %v319
        %354 = vmatpush1.bf16.msra.mxu0 %v318
        %355 = vmatprep.subr.bf16.mxu0 0
        %356 = vmatpush2.bf16.msra.mxu0 0
        %357 = vmatprep.subr.bf16.mxu0 0
        %358 = vmatpush2.bf16.msra.mxu0 0
        %359 = vmatprep.subr.bf16.mxu0 0
        %360 = vmatpush2.bf16.msra.mxu0 0
        %361 = vmatprep.subr.bf16.mxu0 0
        %362 = vmatpush2.bf16.msra.mxu0 0
        %363 = vmatprep.subr.bf16.mxu0 0
        %364 = vmatpush2.bf16.msra.mxu0 0
        %365 = vmatprep.subr.bf16.mxu0 0
        %366 = vmatpush2.bf16.msra.mxu0 0
        %367 = vmatprep.subr.bf16.mxu0 0
        %368 = vmatpush2.bf16.msra.mxu0 0
        %369 = vmatprep.subr.bf16.mxu0 0
        %370 = vmatpush2.bf16.msra.mxu0 0
        %371 = vmatprep.mubr.bf16.mxu0 0
        %372 = vmatmul.mubr.bf16.gmra.mxu0 %v330
        %v373 = vpop.f32.mrf.mxu0
        %v374 = vadd.f32 %v326, %v373
        %v375 = vpop.f32.mrf.mxu0
        %v376 = vadd.f32 %v326, %v375
        %v377 = vpop.f32.mrf.mxu0
        %v378 = vpop.f32.mrf.mxu0
        %379 = vdwg.mxu0
        %v380 = vmax.f32 %v374, 0.0
        %v381 = vmax.f32 %v376, 0.0
        %382 = vrot.lane.b32.xlu0 %v380, 1
        %v383 = vpop.permute.xlu0 %382
        %384 = vrot.lane.b32.xlu0 %v381, 1
        %v385 = vpop.permute.xlu0 %384
        %vm386 = vcmp.lt.s32.totalorder %v277, 1
        %v387 = vsel %vm386, %v383, %v385
        %v388 = vsel %vm386, %v385, %v383
        %s389 = scalar_lea.vmem [#allocation5], 4
        %v390 = vld [vmem:[%s389] sm:$0x3]
        %v392 = vlaneseq
        %v393 = vshrl.u32 %v392, 7
        %v394 = vsub.s32 0, %v393
        %v395 = vrot.slane %v390, %v394
        %v396 = vlaneseq
        %v397 = vshrl.u32 %v396, 7
        %v398 = vsub.s32 1, %v397
        %v399 = vrot.slane %v390, %v398
        %v402 = vmul.f32 %v388, %v395
        %v403 = vmul.f32 %v387, %v399
        %404 = vrot.lane.b32.xlu0 %v380, 127
        %v405 = vpop.permute.xlu0 %404
        %406 = vrot.lane.b32.xlu0 %v381, 127
        %v407 = vpop.permute.xlu0 %406
        %vm408 = vcmp.lt.s32.totalorder %v277, 127
        %v409 = vsel %vm408, %v405, %v407
        %v410 = vsel %vm408, %v407, %v405
        %s411 = scalar_lea.vmem [#allocation5], 6
        %v412 = vld [vmem:[%s411] sm:$0x3]
        %v414 = vlaneseq
        %v415 = vshrl.u32 %v414, 7
        %v416 = vsub.s32 0, %v415
        %v417 = vrot.slane %v412, %v416
        %v418 = vlaneseq
        %v419 = vshrl.u32 %v418, 7
        %v420 = vsub.s32 1, %v419
        %v421 = vrot.slane %v412, %v420
        %v424 = vmul.f32 %v409, %v417
        %v425 = vmul.f32 %v410, %v421
        %s426 = scalar_lea.vmem [#allocation2], 4
        %v427 = vld [vmem:[%s426] sm:$0xf]
        %v428 = vpack.c.bf16 %v380, %v402
        %v429 = vpack.c.bf16 %v381, %v403
        %v430 = vpack.c.bf16 %v424, %v424
        %v431 = vpack.c.bf16 %v425, %v425
        %s432 = scalar_lea.vmem %s2, 8
        %v433 = vld [vmem:[%s432] sm:$0xff]
        %435 = vset.pattern.permute.xlu0 0
        %436 = vperm.xlu0 %435, %v433
        %v437 = vpop.permute.xlu0 %436
        %v440 = vsel %vm328, %v427, 0
        %v443 = vsel %vm332, %v430, 0
        %v446 = vsel %vm332, %v431, 0
        %448 = vmatprep.subr.bf16.mxu0 0
        %449 = vmatpush1.bf16.msra.mxu0 0
        %450 = vmatprep.subr.bf16.mxu0 0
        %451 = vmatpush1.bf16.msra.mxu0 0
        %452 = vmatprep.subr.bf16.mxu0 0
        %453 = vmatpush1.bf16.msra.mxu0 0
        %454 = vmatprep.subr.bf16.mxu0 0
        %455 = vmatpush1.bf16.msra.mxu0 0
        %456 = vmatprep.subr.bf16.mxu0 0
        %457 = vmatpush1.bf16.msra.mxu0 0
        %458 = vmatprep.subr.bf16.mxu0 0
        %459 = vmatpush1.bf16.msra.mxu0 0
        %460 = vmatprep.subr.bf16.mxu0 %v446
        %461 = vmatpush1.bf16.msra.mxu0 %v443
        %462 = vmatprep.subr.bf16.mxu0 %v429
        %463 = vmatpush1.bf16.msra.mxu0 %v428
        %464 = vmatprep.subr.bf16.mxu0 0
        %465 = vmatpush2.bf16.msra.mxu0 0
        %466 = vmatprep.subr.bf16.mxu0 0
        %467 = vmatpush2.bf16.msra.mxu0 0
        %468 = vmatprep.subr.bf16.mxu0 0
        %469 = vmatpush2.bf16.msra.mxu0 0
        %470 = vmatprep.subr.bf16.mxu0 0
        %471 = vmatpush2.bf16.msra.mxu0 0
        %472 = vmatprep.subr.bf16.mxu0 0
        %473 = vmatpush2.bf16.msra.mxu0 0
        %474 = vmatprep.subr.bf16.mxu0 0
        %475 = vmatpush2.bf16.msra.mxu0 0
        %476 = vmatprep.subr.bf16.mxu0 0
        %477 = vmatpush2.bf16.msra.mxu0 0
        %478 = vmatprep.subr.bf16.mxu0 0
        %479 = vmatpush2.bf16.msra.mxu0 0
        %480 = vmatprep.mubr.bf16.mxu0 0
        %481 = vmatmul.mubr.bf16.gmra.mxu0 %v440
        %v482 = vpop.f32.mrf.mxu0
        %v483 = vadd.f32 %v437, %v482
        %v484 = vpop.f32.mrf.mxu0
        %v485 = vadd.f32 %v437, %v484
        %v486 = vpop.f32.mrf.mxu0
        %v487 = vpop.f32.mrf.mxu0
        %488 = vdwg.mxu0
        %v489 = vmax.f32 %v483, 0.0
        %v490 = vmax.f32 %v485, 0.0
        %491 = vrot.lane.b32.xlu0 %v489, 32
        %v492 = vpop.permute.xlu0 %491
        %493 = vrot.lane.b32.xlu0 %v490, 32
        %v494 = vpop.permute.xlu0 %493
        %vm495 = vcmp.lt.s32.totalorder %v277, 32
        %v496 = vsel %vm495, %v492, %v494
        %v497 = vsel %vm495, %v494, %v492
        %s498 = scalar_lea.vmem [#allocation5], 8
        %v499 = vld [vmem:[%s498] sm:$0x3]
        %v501 = vlaneseq
        %v502 = vshrl.u32 %v501, 7
        %v503 = vsub.s32 0, %v502
        %v504 = vrot.slane %v499, %v503
        %v505 = vlaneseq
        %v506 = vshrl.u32 %v505, 7
        %v507 = vsub.s32 1, %v506
        %v508 = vrot.slane %v499, %v507
        %v511 = vmul.f32 %v497, %v504
        %v512 = vmul.f32 %v496, %v508
        %513 = vrot.lane.b32.xlu0 %v489, 96
        %v514 = vpop.permute.xlu0 %513
        %515 = vrot.lane.b32.xlu0 %v490, 96
        %v516 = vpop.permute.xlu0 %515
        %vm517 = vcmp.lt.s32.totalorder %v277, 96
        %v518 = vsel %vm517, %v514, %v516
        %v519 = vsel %vm517, %v516, %v514
        %s520 = scalar_lea.vmem [#allocation5], 10
        %v521 = vld [vmem:[%s520] sm:$0x3]
        %v523 = vlaneseq
        %v524 = vshrl.u32 %v523, 7
        %v525 = vsub.s32 0, %v524
        %v526 = vrot.slane %v521, %v525
        %v527 = vlaneseq
        %v528 = vshrl.u32 %v527, 7
        %v529 = vsub.s32 1, %v528
        %v530 = vrot.slane %v521, %v529
        %v533 = vmul.f32 %v518, %v526
        %v534 = vmul.f32 %v519, %v530
        %s535 = scalar_lea.vmem [#allocation2], 8
        %v536 = vld [vmem:[%s535] sm:$0xf]
        %v537 = vpack.c.bf16 %v489, %v511
        %v538 = vpack.c.bf16 %v490, %v512
        %v539 = vpack.c.bf16 %v533, %v533
        %v540 = vpack.c.bf16 %v534, %v534
        %s541 = scalar_lea.vmem %s2, 16
        %v542 = vld [vmem:[%s541] sm:$0xff]
        %544 = vset.pattern.permute.xlu0 0
        %545 = vperm.xlu0 %544, %v542
        %v546 = vpop.permute.xlu0 %545
        %v549 = vsel %vm328, %v536, 0
        %v552 = vsel %vm332, %v539, 0
        %v555 = vsel %vm332, %v540, 0
        %557 = vmatprep.subr.bf16.mxu0 0
        %558 = vmatpush1.bf16.msra.mxu0 0
        %559 = vmatprep.subr.bf16.mxu0 0
        %560 = vmatpush1.bf16.msra.mxu0 0
        %561 = vmatprep.subr.bf16.mxu0 0
        %562 = vmatpush1.bf16.msra.mxu0 0
        %563 = vmatprep.subr.bf16.mxu0 0
        %564 = vmatpush1.bf16.msra.mxu0 0
        %565 = vmatprep.subr.bf16.mxu0 0
        %566 = vmatpush1.bf16.msra.mxu0 0
        %567 = vmatprep.subr.bf16.mxu0 0
        %568 = vmatpush1.bf16.msra.mxu0 0
        %569 = vmatprep.subr.bf16.mxu0 %v555
        %570 = vmatpush1.bf16.msra.mxu0 %v552
        %571 = vmatprep.subr.bf16.mxu0 %v538
        %572 = vmatpush1.bf16.msra.mxu0 %v537
        %573 = vmatprep.subr.bf16.mxu0 0
        %574 = vmatpush2.bf16.msra.mxu0 0
        %575 = vmatprep.subr.bf16.mxu0 0
        %576 = vmatpush2.bf16.msra.mxu0 0
        %577 = vmatprep.subr.bf16.mxu0 0
        %578 = vmatpush2.bf16.msra.mxu0 0
        %579 = vmatprep.subr.bf16.mxu0 0
        %580 = vmatpush2.bf16.msra.mxu0 0
        %581 = vmatprep.subr.bf16.mxu0 0
        %582 = vmatpush2.bf16.msra.mxu0 0
        %583 = vmatprep.subr.bf16.mxu0 0
        %584 = vmatpush2.bf16.msra.mxu0 0
        %585 = vmatprep.subr.bf16.mxu0 0
        %586 = vmatpush2.bf16.msra.mxu0 0
        %587 = vmatprep.subr.bf16.mxu0 0
        %588 = vmatpush2.bf16.msra.mxu0 0
        %589 = vmatprep.mubr.bf16.mxu0 0
        %590 = vmatmul.mubr.bf16.gmra.mxu0 %v549
        %v591 = vpop.f32.mrf.mxu0
        %v592 = vadd.f32 %v546, %v591
        %v593 = vpop.f32.mrf.mxu0
        %v594 = vadd.f32 %v546, %v593
        %v595 = vpop.f32.mrf.mxu0
        %v596 = vpop.f32.mrf.mxu0
        %597 = vdwg.mxu0
        %v598 = vmax.f32 %v592, 0.0
        %v599 = vmax.f32 %v594, 0.0
        %600 = vrot.lane.b32.xlu0 %v598, 2
        %v601 = vpop.permute.xlu0 %600
        %602 = vrot.lane.b32.xlu0 %v599, 2
        %v603 = vpop.permute.xlu0 %602
        %vm604 = vcmp.lt.s32.totalorder %v277, 2
        %v605 = vsel %vm604, %v601, %v603
        %v606 = vsel %vm604, %v603, %v601
        %s607 = scalar_lea.vmem [#allocation5], 12
        %v608 = vld [vmem:[%s607] sm:$0x3]
        %v610 = vlaneseq
        %v611 = vshrl.u32 %v610, 7
        %v612 = vsub.s32 0, %v611
        %v613 = vrot.slane %v608, %v612
        %v614 = vlaneseq
        %v615 = vshrl.u32 %v614, 7
        %v616 = vsub.s32 1, %v615
        %v617 = vrot.slane %v608, %v616
        %v620 = vmul.f32 %v606, %v613
        %v621 = vmul.f32 %v605, %v617
        %622 = vrot.lane.b32.xlu0 %v598, 126
        %v623 = vpop.permute.xlu0 %622
        %624 = vrot.lane.b32.xlu0 %v599, 126
        %v625 = vpop.permute.xlu0 %624
        %vm626 = vcmp.lt.s32.totalorder %v277, 126
        %v627 = vsel %vm626, %v623, %v625
        %v628 = vsel %vm626, %v625, %v623
        %s629 = scalar_lea.vmem [#allocation5], 14
        %v630 = vld [vmem:[%s629] sm:$0x3]
        %v632 = vlaneseq
        %v633 = vshrl.u32 %v632, 7
        %v634 = vsub.s32 0, %v633
        %v635 = vrot.slane %v630, %v634
        %v636 = vlaneseq
        %v637 = vshrl.u32 %v636, 7
        %v638 = vsub.s32 1, %v637
        %v639 = vrot.slane %v630, %v638
        %v642 = vmul.f32 %v627, %v635
        %v643 = vmul.f32 %v628, %v639
        %s644 = scalar_lea.vmem [#allocation2], 12
        %v645 = vld [vmem:[%s644] sm:$0xf]
        %v646 = vpack.c.bf16 %v598, %v620
        %v647 = vpack.c.bf16 %v599, %v621
        %v648 = vpack.c.bf16 %v642, %v642
        %v649 = vpack.c.bf16 %v643, %v643
        %s650 = scalar_lea.vmem %s2, 24
        %v651 = vld [vmem:[%s650] sm:$0xff]
        %653 = vset.pattern.permute.xlu0 0
        %654 = vperm.xlu0 %653, %v651
        %v655 = vpop.permute.xlu0 %654
        %v658 = vsel %vm328, %v645, 0
        %v661 = vsel %vm332, %v648, 0
        %v664 = vsel %vm332, %v649, 0
        %666 = vmatprep.subr.bf16.mxu0 0
        %667 = vmatpush1.bf16.msra.mxu0 0
        %668 = vmatprep.subr.bf16.mxu0 0
        %669 = vmatpush1.bf16.msra.mxu0 0
        %670 = vmatprep.subr.bf16.mxu0 0
        %671 = vmatpush1.bf16.msra.mxu0 0
        %672 = vmatprep.subr.bf16.mxu0 0
        %673 = vmatpush1.bf16.msra.mxu0 0
        %674 = vmatprep.subr.bf16.mxu0 0
        %675 = vmatpush1.bf16.msra.mxu0 0
        %676 = vmatprep.subr.bf16.mxu0 0
        %677 = vmatpush1.bf16.msra.mxu0 0
        %678 = vmatprep.subr.bf16.mxu0 %v664
        %679 = vmatpush1.bf16.msra.mxu0 %v661
        %680 = vmatprep.subr.bf16.mxu0 %v647
        %681 = vmatpush1.bf16.msra.mxu0 %v646
        %682 = vmatprep.subr.bf16.mxu0 0
        %683 = vmatpush2.bf16.msra.mxu0 0
        %684 = vmatprep.subr.bf16.mxu0 0
        %685 = vmatpush2.bf16.msra.mxu0 0
        %686 = vmatprep.subr.bf16.mxu0 0
        %687 = vmatpush2.bf16.msra.mxu0 0
        %688 = vmatprep.subr.bf16.mxu0 0
        %689 = vmatpush2.bf16.msra.mxu0 0
        %690 = vmatprep.subr.bf16.mxu0 0
        %691 = vmatpush2.bf16.msra.mxu0 0
        %692 = vmatprep.subr.bf16.mxu0 0
        %693 = vmatpush2.bf16.msra.mxu0 0
        %694 = vmatprep.subr.bf16.mxu0 0
        %695 = vmatpush2.bf16.msra.mxu0 0
        %696 = vmatprep.subr.bf16.mxu0 0
        %697 = vmatpush2.bf16.msra.mxu0 0
        %698 = vmatprep.mubr.bf16.mxu0 0
        %699 = vmatmul.mubr.bf16.gmra.mxu0 %v658
        %v700 = vpop.f32.mrf.mxu0
        %v701 = vadd.f32 %v655, %v700
        %v702 = vpop.f32.mrf.mxu0
        %v703 = vadd.f32 %v655, %v702
        %v704 = vpop.f32.mrf.mxu0
        %v705 = vpop.f32.mrf.mxu0
        %706 = vdwg.mxu0
        %707 = vrot.lane.b32.xlu0 %v270, 1
        %v708 = vpop.permute.xlu0 %707
        %709 = vrot.lane.b32.xlu0 %v271, 1
        %v710 = vpop.permute.xlu0 %709
        %v711 = vsel %vm386, %v708, %v710
        %v712 = vsel %vm386, %v710, %v708
        %v713 = vmul.f32 %v712, %v395
        %v714 = vmul.f32 %v711, %v399
        %715 = vrot.lane.b32.xlu0 %v270, 127
        %v716 = vpop.permute.xlu0 %715
        %717 = vrot.lane.b32.xlu0 %v271, 127
        %v718 = vpop.permute.xlu0 %717
        %v719 = vsel %vm408, %v716, %v718
        %v720 = vsel %vm408, %v718, %v716
        %v721 = vmul.f32 %v719, %v417
        %v722 = vmul.f32 %v720, %v421
        %s723 = scalar_lea.vmem [#allocation2], 16
        %v724 = vld [vmem:[%s723] sm:$0xf]
        %v725 = vpack.c.bf16 %v270, %v713
        %v726 = vpack.c.bf16 %v271, %v714
        %v727 = vpack.c.bf16 %v721, %v721
        %v728 = vpack.c.bf16 %v722, %v722
        %s729 = scalar_lea.vmem %s2, 32
        %v730 = vld [vmem:[%s729] sm:$0xff]
        %732 = vset.pattern.permute.xlu0 0
        %733 = vperm.xlu0 %732, %v730
        %v734 = vpop.permute.xlu0 %733
        %v737 = vsel %vm328, %v724, 0
        %v740 = vsel %vm332, %v727, 0
        %v743 = vsel %vm332, %v728, 0
        %745 = vmatprep.subr.bf16.mxu0 0
        %746 = vmatpush1.bf16.msra.mxu0 0
        %747 = vmatprep.subr.bf16.mxu0 0
        %748 = vmatpush1.bf16.msra.mxu0 0
        %749 = vmatprep.subr.bf16.mxu0 0
        %750 = vmatpush1.bf16.msra.mxu0 0
        %751 = vmatprep.subr.bf16.mxu0 0
        %752 = vmatpush1.bf16.msra.mxu0 0
        %753 = vmatprep.subr.bf16.mxu0 0
        %754 = vmatpush1.bf16.msra.mxu0 0
        %755 = vmatprep.subr.bf16.mxu0 0
        %756 = vmatpush1.bf16.msra.mxu0 0
        %757 = vmatprep.subr.bf16.mxu0 %v743
        %758 = vmatpush1.bf16.msra.mxu0 %v740
        %759 = vmatprep.subr.bf16.mxu0 %v726
        %760 = vmatpush1.bf16.msra.mxu0 %v725
        %761 = vmatprep.subr.bf16.mxu0 0
        %762 = vmatpush2.bf16.msra.mxu0 0
        %763 = vmatprep.subr.bf16.mxu0 0
        %764 = vmatpush2.bf16.msra.mxu0 0
        %765 = vmatprep.subr.bf16.mxu0 0
        %766 = vmatpush2.bf16.msra.mxu0 0
        %767 = vmatprep.subr.bf16.mxu0 0
        %768 = vmatpush2.bf16.msra.mxu0 0
        %769 = vmatprep.subr.bf16.mxu0 0
        %770 = vmatpush2.bf16.msra.mxu0 0
        %771 = vmatprep.subr.bf16.mxu0 0
        %772 = vmatpush2.bf16.msra.mxu0 0
        %773 = vmatprep.subr.bf16.mxu0 0
        %774 = vmatpush2.bf16.msra.mxu0 0
        %775 = vmatprep.subr.bf16.mxu0 0
        %776 = vmatpush2.bf16.msra.mxu0 0
        %777 = vmatprep.mubr.bf16.mxu0 0
        %778 = vmatmul.mubr.bf16.gmra.mxu0 %v737
        %v779 = vpop.f32.mrf.mxu0
        %v780 = vadd.f32 %v734, %v779
        %v781 = vpop.f32.mrf.mxu0
        %v782 = vadd.f32 %v734, %v781
        %v783 = vpop.f32.mrf.mxu0
        %v784 = vpop.f32.mrf.mxu0
        %785 = vdwg.mxu0
        %v786 = vmax.f32 %v780, 0.0
        %v787 = vmax.f32 %v782, 0.0
        %788 = vrot.lane.b32.xlu0 %v786, 16
        %v789 = vpop.permute.xlu0 %788
        %790 = vrot.lane.b32.xlu0 %v787, 16
        %v791 = vpop.permute.xlu0 %790
        %v792 = vsel %vm278, %v789, %v791
        %v793 = vsel %vm278, %v791, %v789
        %v794 = vmul.f32 %v793, %v286
        %v795 = vmul.f32 %v792, %v290
        %796 = vrot.lane.b32.xlu0 %v786, 112
        %v797 = vpop.permute.xlu0 %796
        %798 = vrot.lane.b32.xlu0 %v787, 112
        %v799 = vpop.permute.xlu0 %798
        %v800 = vsel %vm299, %v797, %v799
        %v801 = vsel %vm299, %v799, %v797
        %v802 = vmul.f32 %v800, %v308
        %v803 = vmul.f32 %v801, %v312
        %s804 = scalar_lea.vmem [#allocation2], 20
        %v805 = vld [vmem:[%s804] sm:$0xf]
        %v806 = vpack.c.bf16 %v786, %v794
        %v807 = vpack.c.bf16 %v787, %v795
        %v808 = vpack.c.bf16 %v802, %v802
        %v809 = vpack.c.bf16 %v803, %v803
        %s810 = scalar_lea.vmem %s2, 40
        %v811 = vld [vmem:[%s810] sm:$0xff]
        %813 = vset.pattern.permute.xlu0 0
        %814 = vperm.xlu0 %813, %v811
        %v815 = vpop.permute.xlu0 %814
        %v818 = vsel %vm328, %v805, 0
        %v821 = vsel %vm332, %v808, 0
        %v824 = vsel %vm332, %v809, 0
        %826 = vmatprep.subr.bf16.mxu0 0
        %827 = vmatpush1.bf16.msra.mxu0 0
        %828 = vmatprep.subr.bf16.mxu0 0
        %829 = vmatpush1.bf16.msra.mxu0 0
        %830 = vmatprep.subr.bf16.mxu0 0
        %831 = vmatpush1.bf16.msra.mxu0 0
        %832 = vmatprep.subr.bf16.mxu0 0
        %833 = vmatpush1.bf16.msra.mxu0 0
        %834 = vmatprep.subr.bf16.mxu0 0
        %835 = vmatpush1.bf16.msra.mxu0 0
        %836 = vmatprep.subr.bf16.mxu0 0
        %837 = vmatpush1.bf16.msra.mxu0 0
        %838 = vmatprep.subr.bf16.mxu0 %v824
        %839 = vmatpush1.bf16.msra.mxu0 %v821
        %840 = vmatprep.subr.bf16.mxu0 %v807
        %841 = vmatpush1.bf16.msra.mxu0 %v806
        %842 = vmatprep.subr.bf16.mxu0 0
        %843 = vmatpush2.bf16.msra.mxu0 0
        %844 = vmatprep.subr.bf16.mxu0 0
        %845 = vmatpush2.bf16.msra.mxu0 0
        %846 = vmatprep.subr.bf16.mxu0 0
        %847 = vmatpush2.bf16.msra.mxu0 0
        %848 = vmatprep.subr.bf16.mxu0 0
        %849 = vmatpush2.bf16.msra.mxu0 0
        %850 = vmatprep.subr.bf16.mxu0 0
        %851 = vmatpush2.bf16.msra.mxu0 0
        %852 = vmatprep.subr.bf16.mxu0 0
        %853 = vmatpush2.bf16.msra.mxu0 0
        %854 = vmatprep.subr.bf16.mxu0 0
        %855 = vmatpush2.bf16.msra.mxu0 0
        %856 = vmatprep.subr.bf16.mxu0 0
        %857 = vmatpush2.bf16.msra.mxu0 0
        %858 = vmatprep.mubr.bf16.mxu0 0
        %859 = vmatmul.mubr.bf16.gmra.mxu0 %v818
        %v860 = vpop.f32.mrf.mxu0
        %v861 = vadd.f32 %v815, %v860
        %v862 = vpop.f32.mrf.mxu0
        %v863 = vadd.f32 %v815, %v862
        %v864 = vpop.f32.mrf.mxu0
        %v865 = vpop.f32.mrf.mxu0
        %866 = vdwg.mxu0
        %v867 = vmax.f32 %v861, 0.0
        %v868 = vmax.f32 %v863, 0.0
        %869 = vrot.lane.b32.xlu0 %v867, 2
        %v870 = vpop.permute.xlu0 %869
        %871 = vrot.lane.b32.xlu0 %v868, 2
        %v872 = vpop.permute.xlu0 %871
        %v873 = vsel %vm604, %v870, %v872
        %v874 = vsel %vm604, %v872, %v870
        %v875 = vmul.f32 %v874, %v613
        %v876 = vmul.f32 %v873, %v617
        %877 = vrot.lane.b32.xlu0 %v867, 126
        %v878 = vpop.permute.xlu0 %877
        %879 = vrot.lane.b32.xlu0 %v868, 126
        %v880 = vpop.permute.xlu0 %879
        %v881 = vsel %vm626, %v878, %v880
        %v882 = vsel %vm626, %v880, %v878
        %v883 = vmul.f32 %v881, %v635
        %v884 = vmul.f32 %v882, %v639
        %s885 = scalar_lea.vmem [#allocation2], 24
        %v886 = vld [vmem:[%s885] sm:$0xf]
        %v887 = vpack.c.bf16 %v867, %v875
        %v888 = vpack.c.bf16 %v868, %v876
        %v889 = vpack.c.bf16 %v883, %v883
        %v890 = vpack.c.bf16 %v884, %v884
        %s891 = scalar_lea.vmem %s2, 48
        %v892 = vld [vmem:[%s891] sm:$0xff]
        %894 = vset.pattern.permute.xlu0 0
        %895 = vperm.xlu0 %894, %v892
        %v896 = vpop.permute.xlu0 %895
        %v899 = vsel %vm328, %v886, 0
        %v902 = vsel %vm332, %v889, 0
        %v905 = vsel %vm332, %v890, 0
        %907 = vmatprep.subr.bf16.mxu0 0
        %908 = vmatpush1.bf16.msra.mxu0 0
        %909 = vmatprep.subr.bf16.mxu0 0
        %910 = vmatpush1.bf16.msra.mxu0 0
        %911 = vmatprep.subr.bf16.mxu0 0
        %912 = vmatpush1.bf16.msra.mxu0 0
        %913 = vmatprep.subr.bf16.mxu0 0
        %914 = vmatpush1.bf16.msra.mxu0 0
        %915 = vmatprep.subr.bf16.mxu0 0
        %916 = vmatpush1.bf16.msra.mxu0 0
        %917 = vmatprep.subr.bf16.mxu0 0
        %918 = vmatpush1.bf16.msra.mxu0 0
        %919 = vmatprep.subr.bf16.mxu0 %v905
        %920 = vmatpush1.bf16.msra.mxu0 %v902
        %921 = vmatprep.subr.bf16.mxu0 %v888
        %922 = vmatpush1.bf16.msra.mxu0 %v887
        %923 = vmatprep.subr.bf16.mxu0 0
        %924 = vmatpush2.bf16.msra.mxu0 0
        %925 = vmatprep.subr.bf16.mxu0 0
        %926 = vmatpush2.bf16.msra.mxu0 0
        %927 = vmatprep.subr.bf16.mxu0 0
        %928 = vmatpush2.bf16.msra.mxu0 0
        %929 = vmatprep.subr.bf16.mxu0 0
        %930 = vmatpush2.bf16.msra.mxu0 0
        %931 = vmatprep.subr.bf16.mxu0 0
        %932 = vmatpush2.bf16.msra.mxu0 0
        %933 = vmatprep.subr.bf16.mxu0 0
        %934 = vmatpush2.bf16.msra.mxu0 0
        %935 = vmatprep.subr.bf16.mxu0 0
        %936 = vmatpush2.bf16.msra.mxu0 0
        %937 = vmatprep.subr.bf16.mxu0 0
        %938 = vmatpush2.bf16.msra.mxu0 0
        %939 = vmatprep.mubr.bf16.mxu0 0
        %940 = vmatmul.mubr.bf16.gmra.mxu0 %v899
        %v941 = vpop.f32.mrf.mxu0
        %v942 = vadd.f32 %v896, %v941
        %v943 = vpop.f32.mrf.mxu0
        %v944 = vadd.f32 %v896, %v943
        %v945 = vpop.f32.mrf.mxu0
        %v946 = vpop.f32.mrf.mxu0
        %947 = vdwg.mxu0
        %v948 = vmax.f32 %v942, 0.0
        %v949 = vmax.f32 %v944, 0.0
        %950 = vrot.lane.b32.xlu0 %v948, 32
        %v951 = vpop.permute.xlu0 %950
        %952 = vrot.lane.b32.xlu0 %v949, 32
        %v953 = vpop.permute.xlu0 %952
        %v954 = vsel %vm495, %v951, %v953
        %v955 = vsel %vm495, %v953, %v951
        %v956 = vmul.f32 %v955, %v504
        %v957 = vmul.f32 %v954, %v508
        %958 = vrot.lane.b32.xlu0 %v948, 96
        %v959 = vpop.permute.xlu0 %958
        %960 = vrot.lane.b32.xlu0 %v949, 96
        %v961 = vpop.permute.xlu0 %960
        %v962 = vsel %vm517, %v959, %v961
        %v963 = vsel %vm517, %v961, %v959
        %v964 = vmul.f32 %v962, %v526
        %v965 = vmul.f32 %v963, %v530
        %s966 = scalar_lea.vmem [#allocation2], 28
        %v967 = vld [vmem:[%s966] sm:$0xf]
        %v968 = vpack.c.bf16 %v948, %v956
        %v969 = vpack.c.bf16 %v949, %v957
        %v970 = vpack.c.bf16 %v964, %v964
        %v971 = vpack.c.bf16 %v965, %v965
        %s972 = scalar_lea.vmem %s2, 56
        %v973 = vld [vmem:[%s972] sm:$0xff]
        %975 = vset.pattern.permute.xlu0 0
        %976 = vperm.xlu0 %975, %v973
        %v977 = vpop.permute.xlu0 %976
        %v980 = vsel %vm328, %v967, 0
        %v983 = vsel %vm332, %v970, 0
        %v986 = vsel %vm332, %v971, 0
        %988 = vmatprep.subr.bf16.mxu0 0
        %989 = vmatpush1.bf16.msra.mxu0 0
        %990 = vmatprep.subr.bf16.mxu0 0
        %991 = vmatpush1.bf16.msra.mxu0 0
        %992 = vmatprep.subr.bf16.mxu0 0
        %993 = vmatpush1.bf16.msra.mxu0 0
        %994 = vmatprep.subr.bf16.mxu0 0
        %995 = vmatpush1.bf16.msra.mxu0 0
        %996 = vmatprep.subr.bf16.mxu0 0
        %997 = vmatpush1.bf16.msra.mxu0 0
        %998 = vmatprep.subr.bf16.mxu0 0
        %999 = vmatpush1.bf16.msra.mxu0 0
        %1000 = vmatprep.subr.bf16.mxu0 %v986
        %1001 = vmatpush1.bf16.msra.mxu0 %v983
        %1002 = vmatprep.subr.bf16.mxu0 %v969
        %1003 = vmatpush1.bf16.msra.mxu0 %v968
        %1004 = vmatprep.subr.bf16.mxu0 0
        %1005 = vmatpush2.bf16.msra.mxu0 0
        %1006 = vmatprep.subr.bf16.mxu0 0
        %1007 = vmatpush2.bf16.msra.mxu0 0
        %1008 = vmatprep.subr.bf16.mxu0 0
        %1009 = vmatpush2.bf16.msra.mxu0 0
        %1010 = vmatprep.subr.bf16.mxu0 0
        %1011 = vmatpush2.bf16.msra.mxu0 0
        %1012 = vmatprep.subr.bf16.mxu0 0
        %1013 = vmatpush2.bf16.msra.mxu0 0
        %1014 = vmatprep.subr.bf16.mxu0 0
        %1015 = vmatpush2.bf16.msra.mxu0 0
        %1016 = vmatprep.subr.bf16.mxu0 0
        %1017 = vmatpush2.bf16.msra.mxu0 0
        %1018 = vmatprep.subr.bf16.mxu0 0
        %1019 = vmatpush2.bf16.msra.mxu0 0
        %1020 = vmatprep.mubr.bf16.mxu0 0
        %1021 = vmatmul.mubr.bf16.gmra.mxu0 %v980
        %v1022 = vpop.f32.mrf.mxu0
        %v1023 = vadd.f32 %v977, %v1022
        %v1024 = vpop.f32.mrf.mxu0
        %v1025 = vadd.f32 %v977, %v1024
        %v1026 = vpop.f32.mrf.mxu0
        %v1027 = vpop.f32.mrf.mxu0
        %1028 = vdwg.mxu0
        %v1029 = vadd.f32 %v268, %v701
        %v1030 = vadd.f32 %v269, %v703
        %v1031 = vmax.f32 %v1029, 0.0
        %v1032 = vmax.f32 %v1030, 0.0
        %v1033 = vadd.f32 %v270, %v1023
        %v1034 = vadd.f32 %v271, %v1025
        %v1035 = vmax.f32 %v1033, 0.0
        %v1036 = vmax.f32 %v1034, 0.0
        %v1037 = vld [vmem:[#allocation7] sm:$0xff]
        %v1038 = vld [vmem:[#allocation7 + $0x8] sm:$0xff]
        %vm1039 = vcmask 130048
        %v1041 = vsel %vm1039, %v1037, 0
        %v1044 = vsel %vm1039, %v1038, 0
        %1046 = vmatprep.subr.mxu0 0.0
        %1047 = vmatpush1.msra.mxu0 0.0
        %1048 = vmatprep.subr.mxu0 0.0
        %1049 = vmatpush1.msra.mxu0 0.0
        %1050 = vmatprep.subr.mxu0 0.0
        %1051 = vmatpush1.msra.mxu0 0.0
        %1052 = vmatprep.subr.mxu0 0.0
        %1053 = vmatpush1.msra.mxu0 0.0
        %1054 = vmatprep.subr.mxu0 0.0
        %1055 = vmatpush1.msra.mxu0 0.0
        %1056 = vmatprep.subr.mxu0 0.0
        %1057 = vmatpush1.msra.mxu0 0.0
        %1058 = vmatprep.subr.mxu0 0.0
        %1059 = vmatpush1.msra.mxu0 0.0
        %1060 = vmatprep.subr.mxu0 0.0
        %1061 = vmatpush1.msra.mxu0 0.0
        %1062 = vmatprep.subr.mxu0 0.0
        %1063 = vmatpush1.msra.mxu0 0.0
        %1064 = vmatprep.subr.mxu0 0.0
        %1065 = vmatpush1.msra.mxu0 0.0
        %1066 = vmatprep.subr.mxu0 0.0
        %1067 = vmatpush1.msra.mxu0 0.0
        %1068 = vmatprep.subr.mxu0 0.0
        %1069 = vmatpush1.msra.mxu0 0.0
        %1070 = vmatprep.subr.mxu0 0.0
        %1071 = vmatpush1.msra.mxu0 0.0
        %1072 = vmatprep.subr.mxu0 0.0
        %1073 = vmatpush1.msra.mxu0 0.0
        %1074 = vmatprep.subr.mxu0 %v1036
        %1075 = vmatpush1.msra.mxu0 %v1035
        %1076 = vmatprep.subr.mxu0 %v1032
        %1077 = vmatpush1.msra.mxu0 %v1031
        %1078 = vmatprep.subr.mxu0 0.0
        %1079 = vmatpush2.msra.mxu0 0.0
        %1080 = vmatprep.subr.mxu0 0.0
        %1081 = vmatpush2.msra.mxu0 0.0
        %1082 = vmatprep.subr.mxu0 0.0
        %1083 = vmatpush2.msra.mxu0 0.0
        %1084 = vmatprep.subr.mxu0 0.0
        %1085 = vmatpush2.msra.mxu0 0.0
        %1086 = vmatprep.subr.mxu0 0.0
        %1087 = vmatpush2.msra.mxu0 0.0
        %1088 = vmatprep.subr.mxu0 0.0
        %1089 = vmatpush2.msra.mxu0 0.0
        %1090 = vmatprep.subr.mxu0 0.0
        %1091 = vmatpush2.msra.mxu0 0.0
        %1092 = vmatprep.subr.mxu0 0.0
        %1093 = vmatpush2.msra.mxu0 0.0
        %1094 = vmatprep.subr.mxu0 0.0
        %1095 = vmatpush2.msra.mxu0 0.0
        %1096 = vmatprep.subr.mxu0 0.0
        %1097 = vmatpush2.msra.mxu0 0.0
        %1098 = vmatprep.subr.mxu0 0.0
        %1099 = vmatpush2.msra.mxu0 0.0
        %1100 = vmatprep.subr.mxu0 0.0
        %1101 = vmatpush2.msra.mxu0 0.0
        %1102 = vmatprep.subr.mxu0 0.0
        %1103 = vmatpush2.msra.mxu0 0.0
        %1104 = vmatprep.subr.mxu0 0.0
        %1105 = vmatpush2.msra.mxu0 0.0
        %1106 = vmatprep.subr.mxu0 0.0
        %1107 = vmatpush2.msra.mxu0 0.0
        %1108 = vmatprep.subr.mxu0 0.0
        %1109 = vmatpush2.msra.mxu0 0.0
        %1110 = vmatprep.mubr.f32.mxu0 0.0
        %1111 = vmatmul.mubr.f32.gmra.mxu0 %v1041
        %v1112 = vpop.f32.mrf.mxu0
        %v1113 = vadd.f32 0.0, %v1112
        %v1114 = vpop.f32.mrf.mxu0
        %v1115 = vadd.f32 0.0, %v1114
        %1116 = vmatprep.mubr.f32.mxu0 0.0
        %1117 = vmatmul.mubr.f32.gmra.mxu0 %v1044
        %v1118 = vpop.f32.mrf.mxu0
        %v1119 = vadd.f32 0.0, %v1118
        %v1120 = vpop.f32.mrf.mxu0
        %v1121 = vadd.f32 0.0, %v1120
        %1122 = vdwg.mxu0
        %1123 = vst [vmem:[%s261] sm:$0xff] %v1113
        %1124 = vst [vmem:[%s261 + $0x8] sm:$0xff] %v1115
        %1125 = vst [vmem:[%s261 + $0x10] sm:$0xff] %v1119
        %1126 = vst [vmem:[%s261 + $0x18] sm:$0xff] %v1121
        %s1127 = sand.u32 %s139, 1
        %s1128 = scalar_lea.sflag [#allocation4], %s1127
        %s1129 = sand.u32 %s139, 1
        %s1130 = smul.addr %s1129, 32
        %s1131 = scalar_lea.vmem [#allocation8], %s1130
        // Predicated region
        $region53: #{tpu_custom_call.1} parent=39 // pred_check
          %p1132 = pneg %p149
        $region54: #{tpu_custom_call.1} parent=39 // pred_check_branch
          %1134 = sbr.rel (%p1132) target = $region56
        $region55: #{tpu_custom_call.1} parent=39 // pred_region
          %s1136 = ssub.s32 512, 512
          %1137 = vsyncadd %s1128, %s1136
          %s1138 = smul.addr %s21, 4
          %s1139 = smul.addr %s1138, 128
          %s1140 = scalar_lea.hbm %s5, %s1139
          %s1141 = sshll.u32 %s1131, 4
          %s1142 = int_to_ptr.vmem [resolvable:$true] %s1141
          %1147 = dma.vmem_to_hbm [thread:$0]  %s1142, 512, %s1140, %s1128, 256, 256, 16
        $region56: #{tpu_custom_call.1} parent=39 // pred_fallthru
          _
      $region40: #{tpu_custom_call.1} parent=5 // pred_fallthru
        _
      %p1148 = scmp.le.s32.totalorder 2, %s16
      // Predicated region
      $region57: #{tpu_custom_call.1} parent=5 // pred_check
        %p1149 = pneg %p1148
      $region58: #{tpu_custom_call.1} parent=5 // pred_check_branch
        %1151 = sbr.rel (%p1149) target = $region60
      $region59: #{tpu_custom_call.1} parent=5 // pred_region
        %s1152 = ssub.s32 %s16, 2
        // Predicated region
        $region61: #{tpu_custom_call.1} parent=59 // pred_check
          %p1153 = pneg %p155
        $region62: #{tpu_custom_call.1} parent=59 // pred_check_branch
          %1155 = sbr.rel (%p1153) target = $region64
        $region63: #{tpu_custom_call.1} parent=59 // pred_region
          %s1156 = sand.u32 %s140, 1
          %s1157 = scalar_lea.sflag [#allocation4], %s1156
          %s1158 = sand.u32 %s140, 1
          %s1159 = smul.addr %s1158, 32
          %s1160 = scalar_lea.vmem [#allocation8], %s1159
          %1161 = dma.done %s1157, 512
        $region64: #{tpu_custom_call.1} parent=59 // pred_fallthru
          _
      $region60: #{tpu_custom_call.1} parent=5 // pred_fallthru
        _
    $region6: #{tpu_custom_call.1} parent=1 // loop_footer
      %s20 = sadd.s32 1, %s16
    $region7: #{tpu_custom_call.1} parent=1 // loop_footer_branch
      %15 = sbr.rel target = $region3
    $region8: #{tpu_custom_call.1} parent=1 // loop_exit
      _
    %1162 = vsyncpa [#allocation3], 1
    %s1163 = scalar_lea.sflag [#allocation3], 1
    %1164 = vsyncpa %s1163, 1
    %1165 = vsyncpa [#allocation6], 1
    %1166 = vsyncpa [#allocation4], 1
    %s1167 = scalar_lea.sflag [#allocation4], 1
    %1168 = vsyncpa %s1167, 1

</llo_original>
